<compile_context>
chip_gen: v5e
topology: v5e:2x2
jax: 0.10.0
libtpu: 0.0.40
codegen_flags: <defaults>
</compile_context>

<pallas_src>
import functools

import jax
import jax.numpy as jnp
from jax.experimental import pallas as pl
from jax.experimental.pallas import tpu as pltpu


def _gin_kernel(a_ref, hk_ref, h0_ref, w1_ref, b1_ref, w2_ref, b2_ref,
                gamma_ref, beta_ref, o_ref, acc_ref, *, true_d, eps):
    k = pl.program_id(1)

    @pl.when(k == 0)
    def _():
        acc_ref[...] = jnp.zeros_like(acc_ref)

    # --- message passing partial sum: (TM, TK) 0/1 adjacency x (TK, DP) bf16 features
    a = a_ref[...].astype(jnp.bfloat16)              # int8 {0,1} -> exact in bf16
    acc_ref[...] += jnp.dot(a, hk_ref[...], preferred_element_type=jnp.float32)

    @pl.when(k == pl.num_programs(1) - 1)
    def _():
        u = acc_ref[...]                              # (TM, DP) f32 neighbor sums

        # --- MLP: Linear(D -> 4D) -> ReLU -> Linear(4D -> D)  (bf16 MXU, f32 acc)
        z = jnp.dot(u.astype(jnp.bfloat16), w1_ref[...],
                    preferred_element_type=jnp.float32) + b1_ref[...]
        z = jnp.maximum(z, 0.0)
        y = jnp.dot(z.astype(jnp.bfloat16), w2_ref[...],
                    preferred_element_type=jnp.float32) + b2_ref[...]

        # --- residual (f32); padded lanes of y and h0 are exactly zero by construction
        x = y + h0_ref[...]                           # (TM, DP)

        # --- LayerNorm over the TRUE feature dim (pad lanes of x are already zero,
        #     so the mean needs no mask; one mask on diff keeps pad lanes out of var)
        inv_d = 1.0 / float(true_d)
        mean = jnp.sum(x, axis=-1, keepdims=True) * inv_d
        lane = jax.lax.broadcasted_iota(jnp.int32, x.shape, dimension=1)
        diff = jnp.where(lane < true_d, x - mean, 0.0)
        var = jnp.sum(diff * diff, axis=-1, keepdims=True) * inv_d
        out = diff * jax.lax.rsqrt(var + eps) * gamma_ref[...] + beta_ref[...]

        # Dropout with training=False is identity.
        # TODO(synk): training-mode dropout (pltpu.prng_seed + prng_random_bits mask) not emitted.
        o_ref[...] = out.astype(o_ref.dtype)


def graph_isomorphism_forward(adj, h, w1_t, b1, w2_t, b2, gamma, beta,
                              *, tm=256, eps=1e-5):
    """adj: (N,N) with adj[v,u]=1 iff edge u->v; h: (N,D); w1_t: (D,4D); b1: (4D,) or (1,4D);
    w2_t: (4D,D); b2: (1,D); gamma/beta: (1,D).  Returns updated node features (N,D) f32."""
    N, D = h.shape
    H = w1_t.shape[1]

    def rup(x, m):
        return ((x + m - 1) // m) * m

    DP = rup(max(D, 128), 128)            # lane-dense feature dim
    HP = rup(max(H, 128), 128)            # lane-dense MLP hidden dim
    TM = rup(min(tm, rup(N, 32)), 32)     # row tile (int8 adjacency packs 32 rows/sublane grp)
    NP = rup(N, TM)                       # padded node count
    TK = TM                               # contraction tile over neighbors

    f32, bf16 = jnp.float32, jnp.bfloat16
    # Zero padding keeps every matmul and the masked LayerNorm numerically exact.
    # TODO(synk): for multi-layer GIN, cache adj_i8 (and the feature padding) at the
    # caller so this pad/cast pass over A isn't repeated every layer.
    adj_i8 = jnp.zeros((NP, NP), jnp.int8).at[:N, :N].set(adj.astype(jnp.int8))
    h_agg = jnp.zeros((NP, DP), bf16).at[:N, :D].set(h.astype(bf16))    # aggregation operand
    h0_p = jnp.zeros((NP, DP), f32).at[:N, :D].set(h.astype(f32))       # residual operand
    w1_p = jnp.zeros((DP, HP), bf16).at[:D, :H].set(w1_t.astype(bf16))
    b1_p = jnp.zeros((1, HP), f32).at[:, :H].set(jnp.reshape(b1, (1, H)).astype(f32))
    w2_p = jnp.zeros((HP, DP), bf16).at[:H, :D].set(w2_t.astype(bf16))
    b2_p = jnp.zeros((1, DP), f32).at[:, :D].set(jnp.reshape(b2, (1, D)).astype(f32))
    g_p = jnp.zeros((1, DP), f32).at[:, :D].set(jnp.reshape(gamma, (1, D)).astype(f32))
    be_p = jnp.zeros((1, DP), f32).at[:, :D].set(jnp.reshape(beta, (1, D)).astype(f32))

    grid = (NP // TM, NP // TK)
    res = lambda i, k: (0, 0)             # resident across all grid steps (DMA'd once)

    flops = 2 * NP * NP * DP + 2 * NP * DP * HP + 2 * NP * HP * DP
    bytes_accessed = (NP * NP * 1                       # int8 adjacency (dominant stream)
                      + (NP // TM) * NP * DP * 2        # bf16 h_agg re-streamed per row tile
                      + NP * DP * 4                     # f32 residual tiles
                      + (DP * HP + HP * DP) * 2         # bf16 weights (resident)
                      + (HP + 3 * DP) * 4               # biases / gamma / beta
                      + NP * DP * 4)                    # f32 output

    out_p = pl.pallas_call(
        functools.partial(_gin_kernel, true_d=D, eps=eps),
        out_shape=jax.ShapeDtypeStruct((NP, DP), f32),
        grid=grid,
        in_specs=[
            pl.BlockSpec((TM, TK), lambda i, k: (i, k)),   # adjacency block (int8)
            pl.BlockSpec((TK, DP), lambda i, k: (k, 0)),   # bf16 features for aggregation
            pl.BlockSpec((TM, DP), lambda i, k: (i, 0)),   # f32 h0 row tile (residual)
            pl.BlockSpec((DP, HP), res),                   # W1^T  (resident)
            pl.BlockSpec((1, HP), res),                    # b1
            pl.BlockSpec((HP, DP), res),                   # W2^T  (resident)
            pl.BlockSpec((1, DP), res),                    # b2
            pl.BlockSpec((1, DP), res),                    # gamma
            pl.BlockSpec((1, DP), res),                    # beta
        ],
        out_specs=pl.BlockSpec((TM, DP), lambda i, k: (i, 0)),
        scratch_shapes=[pltpu.VMEM((TM, DP), jnp.float32)],  # f32 neighbor-sum accumulator
        compiler_params=pltpu.CompilerParams(
            dimension_semantics=("parallel", "arbitrary"),   # row tiles shard across TCs (v7x)
            vmem_limit_bytes=32 * 1024 * 1024,
        ),
        cost_estimate=pl.CostEstimate(
            flops=flops, transcendentals=NP, bytes_accessed=bytes_accessed),
    )(adj_i8, h_agg, h0_p, w1_p, b1_p, w2_p, b2_p, g_p, be_p)

    return out_p[:N, :D]


def _reference_bf16(adj, h, w1_t, b1, w2_t, b2, gamma, beta, eps=1e-5):
    """Pure-JAX reference mirroring the kernel's bf16 matmul / f32 accumulation numerics."""
    bf = jnp.bfloat16
    u = jnp.dot(adj.astype(bf), h.astype(bf), preferred_element_type=jnp.float32)
    z = jnp.maximum(jnp.dot(u.astype(bf), w1_t.astype(bf),
                            preferred_element_type=jnp.float32) + b1, 0.0)
    y = jnp.dot(z.astype(bf), w2_t.astype(bf), preferred_element_type=jnp.float32) + b2
    x = y + h
    mean = jnp.mean(x, axis=-1, keepdims=True)
    var = jnp.mean((x - mean) ** 2, axis=-1, keepdims=True)
    return (x - mean) * jax.lax.rsqrt(var + eps) * gamma + beta


def _reference_f32(adj, h, w1_t, b1, w2_t, b2, gamma, beta, eps=1e-5):
    """Full-f32 reference matching the original PyTorch module's math."""
    u = adj @ h
    z = jnp.maximum(u @ w1_t + b1, 0.0)
    y = z @ w2_t + b2
    x = y + h
    mean = jnp.mean(x, axis=-1, keepdims=True)
    var = jnp.mean((x - mean) ** 2, axis=-1, keepdims=True)
    return (x - mean) * jax.lax.rsqrt(var + eps) * gamma + beta


if __name__ == "__main__":
    N = 256       # number of graph nodes
    D = 32        # hidden_dim
    H = 4 * D     # MLP hidden dim

    key = jax.random.PRNGKey(0)
    k_h, k_a, k_w1, k_b1, k_w2, k_b2 = jax.random.split(key, 6)

    # node features
    h = jax.random.normal(k_h, (N, D), dtype=jnp.float32)

    # random directed graph adjacency (A[v, u] = 1 iff edge u -> v), ~25% density
    adj = (jax.random.uniform(k_a, (N, N)) < 0.25).astype(jnp.float32)

    # MLP params (PyTorch-style uniform init bounds), stored pre-transposed as (in, out)
    lim1 = 1.0 / jnp.sqrt(D)
    lim2 = 1.0 / jnp.sqrt(H)
    w1_t = jax.random.uniform(k_w1, (D, H), minval=-lim1, maxval=lim1, dtype=jnp.float32)
    b1 = jax.random.uniform(k_b1, (1, H), minval=-lim1, maxval=lim1, dtype=jnp.float32)
    w2_t = jax.random.uniform(k_w2, (H, D), minval=-lim2, maxval=lim2, dtype=jnp.float32)
    b2 = jax.random.uniform(k_b2, (1, D), minval=-lim2, maxval=lim2, dtype=jnp.float32)

    # LayerNorm params (default init)
    gamma = jnp.ones((1, D), dtype=jnp.float32)
    beta = jnp.zeros((1, D), dtype=jnp.float32)

    # tm=128 -> 2x2 grid: exercises multi-row-tile AND multi-K-tile (cross-tile neighbors).
    out = graph_isomorphism_forward(adj, h, w1_t, b1, w2_t, b2, gamma, beta, tm=128)
    out = jax.block_until_ready(out)
    assert out.shape == (N, D)

    # tight check vs. a reference that mirrors the kernel's bf16/f32 numerics
    ref_bf = _reference_bf16(adj, h, w1_t, b1, w2_t, b2, gamma, beta)
    assert jnp.allclose(out, ref_bf, atol=2e-3, rtol=2e-3), (
        float(jnp.max(jnp.abs(out - ref_bf))))

    # looser sanity check vs. the full-f32 PyTorch-equivalent math
    ref_f32 = _reference_f32(adj, h, w1_t, b1, w2_t, b2, gamma, beta)
    assert jnp.allclose(out, ref_f32, atol=1e-1, rtol=1e-1), (
        float(jnp.max(jnp.abs(out - ref_f32))))

    print("KERNEL_OK")
</pallas_src>

<mosaic_0001>
module attributes {stable_mosaic.version = 11 : i64} {
  func.func @_gin_kernel(%arg0: i32, %arg1: i32, %arg2: memref<128x128xi8, #tpu.memory_space<vmem>>, %arg3: memref<128x128xbf16, #tpu.memory_space<vmem>>, %arg4: memref<128x128xf32, #tpu.memory_space<vmem>>, %arg5: memref<128x128xbf16, #tpu.memory_space<vmem>>, %arg6: memref<1x128xf32, #tpu.memory_space<vmem>>, %arg7: memref<128x128xbf16, #tpu.memory_space<vmem>>, %arg8: memref<1x128xf32, #tpu.memory_space<vmem>>, %arg9: memref<1x128xf32, #tpu.memory_space<vmem>>, %arg10: memref<1x128xf32, #tpu.memory_space<vmem>>, %arg11: memref<128x128xf32, #tpu.memory_space<vmem>>, %arg12: memref<128x128xf32, #tpu.memory_space<vmem>>) attributes {dimension_semantics = [#tpu.dimension_semantics<parallel>, #tpu.dimension_semantics<arbitrary>], iteration_bounds = array<i64: 2, 2>, scalar_prefetch = 0 : i64, scratch_operands = 1 : i64, tpu.core_type = #tpu.core_type<tc>, window_params = [{transform_indices = @transform_0, window_bounds = array<i64: 128, 128>}, {transform_indices = @transform_1, window_bounds = array<i64: 128, 128>}, {transform_indices = @transform_2, window_bounds = array<i64: 128, 128>}, {pipeline_mode = #tpu.pipeline_mode<synchronous>, transform_indices = @transform_3, window_bounds = array<i64: 128, 128>}, {pipeline_mode = #tpu.pipeline_mode<synchronous>, transform_indices = @transform_4, window_bounds = array<i64: 1, 128>}, {pipeline_mode = #tpu.pipeline_mode<synchronous>, transform_indices = @transform_5, window_bounds = array<i64: 128, 128>}, {pipeline_mode = #tpu.pipeline_mode<synchronous>, transform_indices = @transform_6, window_bounds = array<i64: 1, 128>}, {pipeline_mode = #tpu.pipeline_mode<synchronous>, transform_indices = @transform_7, window_bounds = array<i64: 1, 128>}, {pipeline_mode = #tpu.pipeline_mode<synchronous>, transform_indices = @transform_8, window_bounds = array<i64: 1, 128>}, {transform_indices = @transform_9, window_bounds = array<i64: 128, 128>}]} {
    %c0_i32 = arith.constant 0 : i32
    %0 = arith.cmpi eq, %arg1, %c0_i32 : i32
    %1 = arith.extui %0 : i1 to i32
    %c0_i32_0 = arith.constant 0 : i32
    %2 = arith.cmpi ne, %1, %c0_i32_0 : i32
    scf.if %2 {
      %cst_9 = arith.constant 0.000000e+00 : f32
      %13 = vector.broadcast %cst_9 : f32 to vector<128x128xf32>
      %c0_10 = arith.constant 0 : index
      %c0_11 = arith.constant 0 : index
      %14 = vector.load %arg12[%c0_10, %c0_11] : memref<128x128xf32, #tpu.memory_space<vmem>>, vector<128x128xf32>
      tpu.vector_store %arg12[%c0_10, %c0_11], %13 {strides = array<i32>} : memref<128x128xf32, #tpu.memory_space<vmem>>, vector<128x128xf32>,
    } else {
    }
    %c0 = arith.constant 0 : index
    %c0_1 = arith.constant 0 : index
    %3 = vector.load %arg2[%c0, %c0_1] : memref<128x128xi8, #tpu.memory_space<vmem>>, vector<128x128xi8>
    %4 = arith.sitofp %3 : vector<128x128xi8> to vector<128x128xbf16>
    %c0_2 = arith.constant 0 : index
    %c0_3 = arith.constant 0 : index
    %5 = vector.load %arg12[%c0_2, %c0_3] : memref<128x128xf32, #tpu.memory_space<vmem>>, vector<128x128xf32>
    %c0_4 = arith.constant 0 : index
    %c0_5 = arith.constant 0 : index
    %6 = vector.load %arg3[%c0_4, %c0_5] : memref<128x128xbf16, #tpu.memory_space<vmem>>, vector<128x128xbf16>
    %cst = arith.constant dense<0.000000e+00> : vector<128x128xf32>
    %7 = tpu.matmul %4, %6, %cst {dimension_numbers = #tpu.dot_dimension_numbers<[1], [0], [0], [1], [0, 0, 1, 1], [], []>} : vector<128x128xbf16>, vector<128x128xbf16>, vector<128x128xf32> -> vector<128x128xf32>
    %8 = arith.addf %5, %7 : vector<128x128xf32>
    %c0_6 = arith.constant 0 : index
    %c0_7 = arith.constant 0 : index
    %9 = vector.load %arg12[%c0_6, %c0_7] : memref<128x128xf32, #tpu.memory_space<vmem>>, vector<128x128xf32>
    tpu.vector_store %arg12[%c0_6, %c0_7], %8 {strides = array<i32>} : memref<128x128xf32, #tpu.memory_space<vmem>>, vector<128x128xf32>,
    %c1_i32 = arith.constant 1 : i32
    %10 = arith.cmpi eq, %arg1, %c1_i32 : i32
    %11 = arith.extui %10 : i1 to i32
    %c0_i32_8 = arith.constant 0 : i32
    %12 = arith.cmpi ne, %11, %c0_i32_8 : i32
    scf.if %12 {
      %c0_9 = arith.constant 0 : index
      %c0_10 = arith.constant 0 : index
      %13 = vector.load %arg12[%c0_9, %c0_10] : memref<128x128xf32, #tpu.memory_space<vmem>>, vector<128x128xf32>
      %14 = arith.truncf %13 : vector<128x128xf32> to vector<128x128xbf16>
      %c0_11 = arith.constant 0 : index
      %c0_12 = arith.constant 0 : index
      %15 = vector.load %arg5[%c0_11, %c0_12] : memref<128x128xbf16, #tpu.memory_space<vmem>>, vector<128x128xbf16>
      %cst_13 = arith.constant dense<0.000000e+00> : vector<128x128xf32>
      %16 = tpu.matmul %14, %15, %cst_13 {dimension_numbers = #tpu.dot_dimension_numbers<[1], [0], [0], [1], [0, 0, 1, 1], [], []>} : vector<128x128xbf16>, vector<128x128xbf16>, vector<128x128xf32> -> vector<128x128xf32>
      %c0_14 = arith.constant 0 : index
      %c0_15 = arith.constant 0 : index
      %17 = vector.load %arg6[%c0_14, %c0_15] : memref<1x128xf32, #tpu.memory_space<vmem>>, vector<1x128xf32>
      %18 = vector.broadcast %17 : vector<1x128xf32> to vector<128x128xf32>
      %19 = arith.addf %16, %18 : vector<128x128xf32>
      %cst_16 = arith.constant 0.000000e+00 : f32
      %20 = vector.broadcast %cst_16 : f32 to vector<128x128xf32>
      %21 = arith.maximumf %19, %20 : vector<128x128xf32>
      %22 = arith.truncf %21 : vector<128x128xf32> to vector<128x128xbf16>
      %c0_17 = arith.constant 0 : index
      %c0_18 = arith.constant 0 : index
      %23 = vector.load %arg7[%c0_17, %c0_18] : memref<128x128xbf16, #tpu.memory_space<vmem>>, vector<128x128xbf16>
      %cst_19 = arith.constant dense<0.000000e+00> : vector<128x128xf32>
      %24 = tpu.matmul %22, %23, %cst_19 {dimension_numbers = #tpu.dot_dimension_numbers<[1], [0], [0], [1], [0, 0, 1, 1], [], []>} : vector<128x128xbf16>, vector<128x128xbf16>, vector<128x128xf32> -> vector<128x128xf32>
      %c0_20 = arith.constant 0 : index
      %c0_21 = arith.constant 0 : index
      %25 = vector.load %arg8[%c0_20, %c0_21] : memref<1x128xf32, #tpu.memory_space<vmem>>, vector<1x128xf32>
      %26 = vector.broadcast %25 : vector<1x128xf32> to vector<128x128xf32>
      %27 = arith.addf %24, %26 : vector<128x128xf32>
      %c0_22 = arith.constant 0 : index
      %c0_23 = arith.constant 0 : index
      %28 = vector.load %arg4[%c0_22, %c0_23] : memref<128x128xf32, #tpu.memory_space<vmem>>, vector<128x128xf32>
      %29 = arith.addf %27, %28 : vector<128x128xf32>
      %cst_24 = arith.constant dense<0.000000e+00> : vector<128xf32>
      %30 = vector.multi_reduction <add>, %29, %cst_24 [1] : vector<128x128xf32> to vector<128xf32>
      %31 = vector.shape_cast %30 : vector<128xf32> to vector<128x1xf32>
      %cst_25 = arith.constant 3.125000e-02 : f32
      %32 = vector.broadcast %cst_25 : f32 to vector<128x1xf32>
      %33 = arith.mulf %31, %32 : vector<128x1xf32>
      %34 = tpu.iota {dimensions = array<i32: 1>} : vector<128x128xi32>
      %c32_i32 = arith.constant 32 : i32
      %35 = vector.broadcast %c32_i32 : i32 to vector<128x128xi32>
      %36 = arith.cmpi slt, %34, %35 : vector<128x128xi32>
      %37 = vector.broadcast %33 : vector<128x1xf32> to vector<128x128xf32>
      %38 = arith.subf %29, %37 : vector<128x128xf32>
      %cst_26 = arith.constant 0.000000e+00 : f32
      %39 = vector.broadcast %cst_26 : f32 to vector<128x128xf32>
      %40 = arith.select %36, %38, %39 : vector<128x128xi1>, vector<128x128xf32>
      %41 = arith.mulf %40, %40 : vector<128x128xf32>
      %cst_27 = arith.constant dense<0.000000e+00> : vector<128xf32>
      %42 = vector.multi_reduction <add>, %41, %cst_27 [1] : vector<128x128xf32> to vector<128xf32>
      %43 = vector.shape_cast %42 : vector<128xf32> to vector<128x1xf32>
      %cst_28 = arith.constant 3.125000e-02 : f32
      %44 = vector.broadcast %cst_28 : f32 to vector<128x1xf32>
      %45 = arith.mulf %43, %44 : vector<128x1xf32>
      %cst_29 = arith.constant 9.99999974E-6 : f32
      %46 = vector.broadcast %cst_29 : f32 to vector<128x1xf32>
      %47 = arith.addf %45, %46 : vector<128x1xf32>
      %48 = math.rsqrt %47 : vector<128x1xf32>
      %49 = vector.broadcast %48 : vector<128x1xf32> to vector<128x128xf32>
      %50 = arith.mulf %40, %49 : vector<128x128xf32>
      %c0_30 = arith.constant 0 : index
      %c0_31 = arith.constant 0 : index
      %51 = vector.load %arg9[%c0_30, %c0_31] : memref<1x128xf32, #tpu.memory_space<vmem>>, vector<1x128xf32>
      %52 = vector.broadcast %51 : vector<1x128xf32> to vector<128x128xf32>
      %53 = arith.mulf %50, %52 : vector<128x128xf32>
      %c0_32 = arith.constant 0 : index
      %c0_33 = arith.constant 0 : index
      %54 = vector.load %arg10[%c0_32, %c0_33] : memref<1x128xf32, #tpu.memory_space<vmem>>, vector<1x128xf32>
      %55 = vector.broadcast %54 : vector<1x128xf32> to vector<128x128xf32>
      %56 = arith.addf %53, %55 : vector<128x128xf32>
      %c0_34 = arith.constant 0 : index
      %c0_35 = arith.constant 0 : index
      %57 = vector.load %arg11[%c0_34, %c0_35] : memref<128x128xf32, #tpu.memory_space<vmem>>, vector<128x128xf32>
      tpu.vector_store %arg11[%c0_34, %c0_35], %56 {strides = array<i32>} : memref<128x128xf32, #tpu.memory_space<vmem>>, vector<128x128xf32>,
    } else {
    }
    return
  }
  func.func @transform_0(%arg0: i32, %arg1: i32) -> (i32, i32) {
    %c0_i32 = arith.constant 0 : i32
    return %arg0, %arg1 : i32, i32
  }
  func.func @transform_1(%arg0: i32, %arg1: i32) -> (i32, i32) {
    %c0_i32 = arith.constant 0 : i32
    %c0_i32_0 = arith.constant 0 : i32
    return %arg1, %c0_i32 : i32, i32
  }
  func.func @transform_2(%arg0: i32, %arg1: i32) -> (i32, i32) {
    %c0_i32 = arith.constant 0 : i32
    %c0_i32_0 = arith.constant 0 : i32
    return %arg0, %c0_i32 : i32, i32
  }
  func.func @transform_3(%arg0: i32, %arg1: i32) -> (i32, i32) {
    %c0_i32 = arith.constant 0 : i32
    %c0_i32_0 = arith.constant 0 : i32
    %c0_i32_1 = arith.constant 0 : i32
    return %c0_i32, %c0_i32_0 : i32, i32
  }
  func.func @transform_4(%arg0: i32, %arg1: i32) -> (i32, i32) {
    %c0_i32 = arith.constant 0 : i32
    %c0_i32_0 = arith.constant 0 : i32
    %c0_i32_1 = arith.constant 0 : i32
    return %c0_i32, %c0_i32_0 : i32, i32
  }
  func.func @transform_5(%arg0: i32, %arg1: i32) -> (i32, i32) {
    %c0_i32 = arith.constant 0 : i32
    %c0_i32_0 = arith.constant 0 : i32
    %c0_i32_1 = arith.constant 0 : i32
    return %c0_i32, %c0_i32_0 : i32, i32
  }
  func.func @transform_6(%arg0: i32, %arg1: i32) -> (i32, i32) {
    %c0_i32 = arith.constant 0 : i32
    %c0_i32_0 = arith.constant 0 : i32
    %c0_i32_1 = arith.constant 0 : i32
    return %c0_i32, %c0_i32_0 : i32, i32
  }
  func.func @transform_7(%arg0: i32, %arg1: i32) -> (i32, i32) {
    %c0_i32 = arith.constant 0 : i32
    %c0_i32_0 = arith.constant 0 : i32
    %c0_i32_1 = arith.constant 0 : i32
    return %c0_i32, %c0_i32_0 : i32, i32
  }
  func.func @transform_8(%arg0: i32, %arg1: i32) -> (i32, i32) {
    %c0_i32 = arith.constant 0 : i32
    %c0_i32_0 = arith.constant 0 : i32
    %c0_i32_1 = arith.constant 0 : i32
    return %c0_i32, %c0_i32_0 : i32, i32
  }
  func.func @transform_9(%arg0: i32, %arg1: i32) -> (i32, i32) {
    %c0_i32 = arith.constant 0 : i32
    %c0_i32_0 = arith.constant 0 : i32
    return %arg0, %c0_i32 : i32, i32
  }
}

</mosaic_0001>

<llo_original>
// kernel: tpu_custom_call.1
$region0: #{tpu_custom_call.1}
  #allocation0 [shape = 'u32[]', space=smem, size = 0x4, offset = 0x4, fixed_abs, tag = 'smem constant byte address 0x4 - core index']
  #allocation1 [shape = 'u32[72,128]{1,0:T(1,128)}', space=vmem, size = 0x9000, scoped, tag = 'internal scratch']
  #allocation2 [shape = 'f32[128,128]{1,0:T(8,128)}', space=vmem, size = 0x10000, scoped, tag = 'scratch operand']
  %s0 = inlined_call_operand.hbm [shape: s8[256,256], index: 0, kind: input, shape index: {}]
  %s1 = inlined_call_operand.hbm [shape: bf16[256,128], index: 1, kind: input, shape index: {}]
  %s2 = inlined_call_operand.hbm [shape: f32[256,128], index: 2, kind: input, shape index: {}]
  %s3 = inlined_call_operand.hbm [shape: bf16[128,128], index: 3, kind: input, shape index: {}]
  %s4 = inlined_call_operand.vmem [shape: f32[1,128], index: 4, kind: input, shape index: {}]
  %s5 = inlined_call_operand.hbm [shape: bf16[128,128], index: 5, kind: input, shape index: {}]
  %s6 = inlined_call_operand.vmem [shape: f32[1,128], index: 6, kind: input, shape index: {}]
  %s7 = inlined_call_operand.vmem [shape: f32[1,128], index: 7, kind: input, shape index: {}]
  %s8 = inlined_call_operand.vmem [shape: f32[1,128], index: 8, kind: input, shape index: {}]
  %s9 = inlined_call_operand.hbm [shape: f32[256,128], index: 9, kind: output, shape index: {}]
  %s10 = sld [smem:[#allocation0]]
  $region97: #{tpu_custom_call.1} parent=0
    _
  %s12 = ssub.s32 1, %s10
  %s13 = scalar_select 0, %s12, %s10
  $region1: #{tpu_custom_call.1} parent=0
    #allocation3 [shape = 'u8[32768]{0}', space=vmem, size = 0x8000, scoped, tag = 'input window, operand 0']
    #allocation4 [shape = 's32[2]{0}', space=sflag, size = 0x8, scoped, tag = 'scoped memory for tpu_custom_call.1']
    #allocation5 [shape = 's32[2]{0}', space=sflag, size = 0x8, scoped, tag = 'scoped memory for tpu_custom_call.1']
    #allocation6 [shape = 'u8[65536]{0}', space=vmem, size = 0x10000, scoped, tag = 'input window, operand 1']
    #allocation7 [shape = 's32[2]{0}', space=sflag, size = 0x8, scoped, tag = 'scoped memory for tpu_custom_call.1']
    #allocation8 [shape = 'u8[131072]{0}', space=vmem, size = 0x20000, scoped, tag = 'input window, operand 2']
    #allocation9 [shape = 'u8[32768]{0}', space=vmem, size = 0x8000, scoped, tag = 'input window, operand 3, single buffered']
    #allocation10 [shape = 's32[1]{0}', space=sflag, size = 0x4, scoped, tag = 'scoped memory for tpu_custom_call.1']
    #allocation11 [shape = 'u8[32768]{0}', space=vmem, size = 0x8000, scoped, tag = 'input window, operand 5, single buffered']
    #allocation12 [shape = 'u8[131072]{0}', space=vmem, size = 0x20000, scoped, tag = 'output window, operand 0']
    %14 = vsyncpa [#allocation4], 0
    %s15 = scalar_lea.sflag [#allocation4], 1
    %16 = vsyncpa %s15, 0
    %17 = vsyncpa [#allocation7], 0
    %s18 = scalar_lea.sflag [#allocation7], 1
    %19 = vsyncpa %s18, 0
    %20 = vsyncpa [#allocation10], 0
    %21 = vsyncpa [#allocation5], 0
    %s22 = scalar_lea.sflag [#allocation5], 1
    %23 = vsyncpa %s22, 0
    loop: start=0, step=1, limit=6
    $region2: #{tpu_custom_call.1} parent=1 // loop_pre_header
      _
    $region3: #{tpu_custom_call.1} parent=1 // loop_header
      %s25 = sphi 0, %s29
      %p26 = scmp.ge.s32.totalorder %s25, 6
      %s32 = sphi 0, %s44
      %s33 = sphi 0, %s40
      %s34 = sphi 0, %s32
      %s35 = sphi 0, %s33
      %s36 = sphi 0, %s34
      %s37 = sphi 0, %s35
      %s49 = sphi 0, %s51
      %s52 = sphi 0, %s49
      %s53 = sphi 0, %s52
      %s69 = sphi 0, %s53
      %s75 = sphi 0, %s77
      %s78 = sphi 0, %s75
      %s79 = sphi 0, %s78
      %s95 = sphi 0, %s79
      %s101 = sphi 0, %s103
      %s104 = sphi 0, %s101
      %s105 = sphi 0, %s104
      %s121 = sphi 0, %s105
      %s125 = sphi 0, %s125
      %s127 = sphi 0, %s125
      %s128 = sphi 0, %s127
      %s142 = sphi 0, %s128
      %s146 = sphi 0, %s146
      %s148 = sphi 0, %s146
      %s149 = sphi 0, %s148
      %s163 = sphi 0, %s149
      %s167 = sphi 0, %s167
      %s169 = sphi 0, %s167
      %s170 = sphi 0, %s169
      %s184 = sphi 0, %s170
      %s188 = sphi 0, %s188
      %s190 = sphi 0, %s188
      %s191 = sphi 0, %s190
      %s205 = sphi 0, %s191
      %s209 = sphi 0, %s209
      %s211 = sphi 0, %s209
      %s212 = sphi 0, %s211
      %s226 = sphi 0, %s212
      %s230 = sphi 0, %s230
      %s232 = sphi 0, %s230
      %s233 = sphi 0, %s232
      %s247 = sphi 0, %s233
      %s253 = sphi 0, %s255
      %s256 = sphi 0, %s253
      %s257 = sphi 0, %s256
      %s273 = sphi 0, %s257
    $region4: #{tpu_custom_call.1} parent=1 // loop_header_branch
      %28 = sbr.rel (%p26) target = $region8
    $region5: #{tpu_custom_call.1} parent=1 // loop_body
      %s30 = ssub.s32 %s25, 1
      %s31 = ssub.s32 %s25, 2
      %s38 = sadd.s32 1, %s33
      %p39 = scmp.ge.s32.totalorder %s38, 2
      %s40 = scalar_select %p39, 0, %s38
      %s41 = sadd.s32 1, %s32
      %s42 = scalar_select %p39, %s41, %s32
      %p43 = scmp.ge.s32.totalorder %s42, 2
      %s44 = scalar_select %p43, 0, %s42
      %s45 = ssub.s32 %s32, %s44
      %s46 = ssub.s32 %s33, %s40
      %s47 = sor.u32 %s45, %s46
      %p48 = scmp.eq.s32.totalorder %s47, 0
      %s50 = sadd.s32 %s49, 1
      %s51 = scalar_select %p48, %s49, %s50
      %p54 = pneg %p48
      %p55 = scmp.eq.s32.totalorder %s25, 3
      %p56 = por %p54, %p55
      %p57 = scmp.ne.s32.totalorder %s49, %s52
      %p58 = scmp.eq.s32.totalorder %s25, 0
      %p59 = por %p57, %p58
      %p60 = scmp.ne.s32.totalorder %s49, %s52
      %p61 = scmp.eq.s32.totalorder %s30, 3
      %p62 = por %p60, %p61
      %p63 = scmp.ne.s32.totalorder %s52, %s53
      %p64 = scmp.eq.s32.totalorder %s30, 0
      %p65 = por %p63, %p64
      %p66 = scmp.ne.s32.totalorder %s52, %s53
      %p67 = scmp.eq.s32.totalorder %s31, 3
      %p68 = por %p66, %p67
      %p70 = scmp.ne.s32.totalorder %s53, %s69
      %p71 = scmp.eq.s32.totalorder %s31, 0
      %p72 = por %p70, %p71
      %s73 = ssub.s32 %s33, %s40
      %p74 = scmp.eq.s32.totalorder %s73, 0
      %s76 = sadd.s32 %s75, 1
      %s77 = scalar_select %p74, %s75, %s76
      %p80 = pneg %p74
      %p81 = scmp.eq.s32.totalorder %s25, 3
      %p82 = por %p80, %p81
      %p83 = scmp.ne.s32.totalorder %s75, %s78
      %p84 = scmp.eq.s32.totalorder %s25, 0
      %p85 = por %p83, %p84
      %p86 = scmp.ne.s32.totalorder %s75, %s78
      %p87 = scmp.eq.s32.totalorder %s30, 3
      %p88 = por %p86, %p87
      %p89 = scmp.ne.s32.totalorder %s78, %s79
      %p90 = scmp.eq.s32.totalorder %s30, 0
      %p91 = por %p89, %p90
      %p92 = scmp.ne.s32.totalorder %s78, %s79
      %p93 = scmp.eq.s32.totalorder %s31, 3
      %p94 = por %p92, %p93
      %p96 = scmp.ne.s32.totalorder %s79, %s95
      %p97 = scmp.eq.s32.totalorder %s31, 0
      %p98 = por %p96, %p97
      %s99 = ssub.s32 %s32, %s44
      %p100 = scmp.eq.s32.totalorder %s99, 0
      %s102 = sadd.s32 %s101, 1
      %s103 = scalar_select %p100, %s101, %s102
      %p106 = pneg %p100
      %p107 = scmp.eq.s32.totalorder %s25, 3
      %p108 = por %p106, %p107
      %p109 = scmp.ne.s32.totalorder %s101, %s104
      %p110 = scmp.eq.s32.totalorder %s25, 0
      %p111 = por %p109, %p110
      %p112 = scmp.ne.s32.totalorder %s101, %s104
      %p113 = scmp.eq.s32.totalorder %s30, 3
      %p114 = por %p112, %p113
      %p115 = scmp.ne.s32.totalorder %s104, %s105
      %p116 = scmp.eq.s32.totalorder %s30, 0
      %p117 = por %p115, %p116
      %p118 = scmp.ne.s32.totalorder %s104, %s105
      %p119 = scmp.eq.s32.totalorder %s31, 3
      %p120 = por %p118, %p119
      %p122 = scmp.ne.s32.totalorder %s105, %s121
      %p123 = scmp.eq.s32.totalorder %s31, 0
      %p124 = por %p122, %p123
      %s126 = sadd.s32 %s125, 1
      %p129 = scmp.eq.s32.totalorder %s25, 3
      %p130 = scmp.ne.s32.totalorder %s125, %s127
      %p131 = scmp.eq.s32.totalorder %s25, 0
      %p132 = por %p130, %p131
      %p133 = scmp.ne.s32.totalorder %s125, %s127
      %p134 = scmp.eq.s32.totalorder %s30, 3
      %p135 = por %p133, %p134
      %p136 = scmp.ne.s32.totalorder %s127, %s128
      %p137 = scmp.eq.s32.totalorder %s30, 0
      %p138 = por %p136, %p137
      %p139 = scmp.ne.s32.totalorder %s127, %s128
      %p140 = scmp.eq.s32.totalorder %s31, 3
      %p141 = por %p139, %p140
      %p143 = scmp.ne.s32.totalorder %s128, %s142
      %p144 = scmp.eq.s32.totalorder %s31, 0
      %p145 = por %p143, %p144
      %s147 = sadd.s32 %s146, 1
      %p150 = scmp.eq.s32.totalorder %s25, 3
      %p151 = scmp.ne.s32.totalorder %s146, %s148
      %p152 = scmp.eq.s32.totalorder %s25, 0
      %p153 = por %p151, %p152
      %p154 = scmp.ne.s32.totalorder %s146, %s148
      %p155 = scmp.eq.s32.totalorder %s30, 3
      %p156 = por %p154, %p155
      %p157 = scmp.ne.s32.totalorder %s148, %s149
      %p158 = scmp.eq.s32.totalorder %s30, 0
      %p159 = por %p157, %p158
      %p160 = scmp.ne.s32.totalorder %s148, %s149
      %p161 = scmp.eq.s32.totalorder %s31, 3
      %p162 = por %p160, %p161
      %p164 = scmp.ne.s32.totalorder %s149, %s163
      %p165 = scmp.eq.s32.totalorder %s31, 0
      %p166 = por %p164, %p165
      %s168 = sadd.s32 %s167, 1
      %p171 = scmp.eq.s32.totalorder %s25, 3
      %p172 = scmp.ne.s32.totalorder %s167, %s169
      %p173 = scmp.eq.s32.totalorder %s25, 0
      %p174 = por %p172, %p173
      %p175 = scmp.ne.s32.totalorder %s167, %s169
      %p176 = scmp.eq.s32.totalorder %s30, 3
      %p177 = por %p175, %p176
      %p178 = scmp.ne.s32.totalorder %s169, %s170
      %p179 = scmp.eq.s32.totalorder %s30, 0
      %p180 = por %p178, %p179
      %p181 = scmp.ne.s32.totalorder %s169, %s170
      %p182 = scmp.eq.s32.totalorder %s31, 3
      %p183 = por %p181, %p182
      %p185 = scmp.ne.s32.totalorder %s170, %s184
      %p186 = scmp.eq.s32.totalorder %s31, 0
      %p187 = por %p185, %p186
      %s189 = sadd.s32 %s188, 1
      %p192 = scmp.eq.s32.totalorder %s25, 3
      %p193 = scmp.ne.s32.totalorder %s188, %s190
      %p194 = scmp.eq.s32.totalorder %s25, 0
      %p195 = por %p193, %p194
      %p196 = scmp.ne.s32.totalorder %s188, %s190
      %p197 = scmp.eq.s32.totalorder %s30, 3
      %p198 = por %p196, %p197
      %p199 = scmp.ne.s32.totalorder %s190, %s191
      %p200 = scmp.eq.s32.totalorder %s30, 0
      %p201 = por %p199, %p200
      %p202 = scmp.ne.s32.totalorder %s190, %s191
      %p203 = scmp.eq.s32.totalorder %s31, 3
      %p204 = por %p202, %p203
      %p206 = scmp.ne.s32.totalorder %s191, %s205
      %p207 = scmp.eq.s32.totalorder %s31, 0
      %p208 = por %p206, %p207
      %s210 = sadd.s32 %s209, 1
      %p213 = scmp.eq.s32.totalorder %s25, 3
      %p214 = scmp.ne.s32.totalorder %s209, %s211
      %p215 = scmp.eq.s32.totalorder %s25, 0
      %p216 = por %p214, %p215
      %p217 = scmp.ne.s32.totalorder %s209, %s211
      %p218 = scmp.eq.s32.totalorder %s30, 3
      %p219 = por %p217, %p218
      %p220 = scmp.ne.s32.totalorder %s211, %s212
      %p221 = scmp.eq.s32.totalorder %s30, 0
      %p222 = por %p220, %p221
      %p223 = scmp.ne.s32.totalorder %s211, %s212
      %p224 = scmp.eq.s32.totalorder %s31, 3
      %p225 = por %p223, %p224
      %p227 = scmp.ne.s32.totalorder %s212, %s226
      %p228 = scmp.eq.s32.totalorder %s31, 0
      %p229 = por %p227, %p228
      %s231 = sadd.s32 %s230, 1
      %p234 = scmp.eq.s32.totalorder %s25, 3
      %p235 = scmp.ne.s32.totalorder %s230, %s232
      %p236 = scmp.eq.s32.totalorder %s25, 0
      %p237 = por %p235, %p236
      %p238 = scmp.ne.s32.totalorder %s230, %s232
      %p239 = scmp.eq.s32.totalorder %s30, 3
      %p240 = por %p238, %p239
      %p241 = scmp.ne.s32.totalorder %s232, %s233
      %p242 = scmp.eq.s32.totalorder %s30, 0
      %p243 = por %p241, %p242
      %p244 = scmp.ne.s32.totalorder %s232, %s233
      %p245 = scmp.eq.s32.totalorder %s31, 3
      %p246 = por %p244, %p245
      %p248 = scmp.ne.s32.totalorder %s233, %s247
      %p249 = scmp.eq.s32.totalorder %s31, 0
      %p250 = por %p248, %p249
      %s251 = ssub.s32 %s32, %s44
      %p252 = scmp.eq.s32.totalorder %s251, 0
      %s254 = sadd.s32 %s253, 1
      %s255 = scalar_select %p252, %s253, %s254
      %p258 = pneg %p252
      %p259 = scmp.eq.s32.totalorder %s25, 3
      %p260 = por %p258, %p259
      %p261 = scmp.ne.s32.totalorder %s253, %s256
      %p262 = scmp.eq.s32.totalorder %s25, 0
      %p263 = por %p261, %p262
      %p264 = scmp.ne.s32.totalorder %s253, %s256
      %p265 = scmp.eq.s32.totalorder %s30, 3
      %p266 = por %p264, %p265
      %p267 = scmp.ne.s32.totalorder %s256, %s257
      %p268 = scmp.eq.s32.totalorder %s30, 0
      %p269 = por %p267, %p268
      %p270 = scmp.ne.s32.totalorder %s256, %s257
      %p271 = scmp.eq.s32.totalorder %s31, 3
      %p272 = por %p270, %p271
      %p274 = scmp.ne.s32.totalorder %s257, %s273
      %p275 = scmp.eq.s32.totalorder %s31, 0
      %p276 = por %p274, %p275
      %p277 = scmp.le.s32.totalorder 1, %s25
      %p278 = scmp.lt.s32.totalorder %s25, 5
      %p279 = pnand %p277, %p278
      %p280 = pneg %p279
      // Predicated region
      $region9: #{tpu_custom_call.1} parent=5 // pred_check
        _
      $region10: #{tpu_custom_call.1} parent=5 // pred_check_branch
        %282 = sbr.rel (%p279) target = $region12
      $region11: #{tpu_custom_call.1} parent=5 // pred_region
        %s283 = ssub.s32 %s25, 1
        // Predicated region
        $region13: #{tpu_custom_call.1} parent=11 // pred_check
          %p284 = pneg %p138
        $region14: #{tpu_custom_call.1} parent=11 // pred_check_branch
          %286 = sbr.rel (%p284) target = $region16
        $region15: #{tpu_custom_call.1} parent=11 // pred_region
          %288 = vsyncadd [#allocation10], 0
          %s289 = sshll.u32 %s3, 4
          %s290 = int_to_ptr.hbm [resolvable:$true] %s289
          %s291 = sshll.u32 [#allocation9], 4
          %s292 = int_to_ptr.vmem [resolvable:$true] %s291
          %297 = dma.hbm_to_vmem [thread:$0]  %s290, 1024, %s292, [#allocation10], 64, 64, 4
        $region16: #{tpu_custom_call.1} parent=11 // pred_fallthru
          _
        // Predicated region
        $region17: #{tpu_custom_call.1} parent=11 // pred_check
          %p298 = pneg %p159
        $region18: #{tpu_custom_call.1} parent=11 // pred_check_branch
          %300 = sbr.rel (%p298) target = $region20
        $region19: #{tpu_custom_call.1} parent=11 // pred_region
          _
        $region20: #{tpu_custom_call.1} parent=11 // pred_fallthru
          _
        // Predicated region
        $region21: #{tpu_custom_call.1} parent=11 // pred_check
          %p301 = pneg %p180
        $region22: #{tpu_custom_call.1} parent=11 // pred_check_branch
          %303 = sbr.rel (%p301) target = $region24
        $region23: #{tpu_custom_call.1} parent=11 // pred_region
          %305 = vsyncadd [#allocation10], 0
          %s306 = sshll.u32 %s5, 4
          %s307 = int_to_ptr.hbm [resolvable:$true] %s306
          %s308 = sshll.u32 [#allocation11], 4
          %s309 = int_to_ptr.vmem [resolvable:$true] %s308
          %314 = dma.hbm_to_vmem [thread:$0]  %s307, 1024, %s309, [#allocation10], 64, 64, 4
        $region24: #{tpu_custom_call.1} parent=11 // pred_fallthru
          _
        // Predicated region
        $region25: #{tpu_custom_call.1} parent=11 // pred_check
          %p315 = pneg %p201
        $region26: #{tpu_custom_call.1} parent=11 // pred_check_branch
          %317 = sbr.rel (%p315) target = $region28
        $region27: #{tpu_custom_call.1} parent=11 // pred_region
          _
        $region28: #{tpu_custom_call.1} parent=11 // pred_fallthru
          _
        // Predicated region
        $region29: #{tpu_custom_call.1} parent=11 // pred_check
          %p318 = pneg %p222
        $region30: #{tpu_custom_call.1} parent=11 // pred_check_branch
          %320 = sbr.rel (%p318) target = $region32
        $region31: #{tpu_custom_call.1} parent=11 // pred_region
          _
        $region32: #{tpu_custom_call.1} parent=11 // pred_fallthru
          _
        // Predicated region
        $region33: #{tpu_custom_call.1} parent=11 // pred_check
          %p321 = pneg %p243
        $region34: #{tpu_custom_call.1} parent=11 // pred_check_branch
          %323 = sbr.rel (%p321) target = $region36
        $region35: #{tpu_custom_call.1} parent=11 // pred_region
          _
        $region36: #{tpu_custom_call.1} parent=11 // pred_fallthru
          _
      $region12: #{tpu_custom_call.1} parent=5 // pred_fallthru
        _
      %p324 = scmp.lt.s32.totalorder %s25, 4
      // Predicated region
      $region37: #{tpu_custom_call.1} parent=5 // pred_check
        %p325 = pneg %p324
      $region38: #{tpu_custom_call.1} parent=5 // pred_check_branch
        %327 = sbr.rel (%p325) target = $region40
      $region39: #{tpu_custom_call.1} parent=5 // pred_region
        // Predicated region
        $region41: #{tpu_custom_call.1} parent=39 // pred_check
          %p328 = pneg %p59
        $region42: #{tpu_custom_call.1} parent=39 // pred_check_branch
          %330 = sbr.rel (%p328) target = $region44
        $region43: #{tpu_custom_call.1} parent=39 // pred_region
          %s331 = sand.u32 %s49, 1
          %s332 = scalar_lea.sflag [#allocation4], %s331
          %s333 = sand.u32 %s49, 1
          %s334 = smul.addr %s333, 32
          %s335 = scalar_lea.vmem [#allocation3], %s334
          %s336 = smul.u32 4, %s32
          %338 = vsyncadd %s332, 0
          %s339 = smul.addr %s336, 2
          %s340 = sadd.s32 %s33, %s339
          %s341 = smul.addr %s340, 8
          %s342 = scalar_lea.hbm %s0, %s341
          %s343 = sshll.u32 %s342, 4
          %s344 = int_to_ptr.hbm [resolvable:$true] %s343
          %s345 = sshll.u32 %s335, 4
          %s346 = int_to_ptr.vmem [resolvable:$true] %s345
          %351 = dma.hbm_to_vmem [thread:$0]  %s344, 512, %s346, %s332, 256, 128, 8
        $region44: #{tpu_custom_call.1} parent=39 // pred_fallthru
          _
        // Predicated region
        $region45: #{tpu_custom_call.1} parent=39 // pred_check
          %p352 = pneg %p85
        $region46: #{tpu_custom_call.1} parent=39 // pred_check_branch
          %354 = sbr.rel (%p352) target = $region48
        $region47: #{tpu_custom_call.1} parent=39 // pred_region
          %s355 = sand.u32 %s25, 1
          %s356 = scalar_lea.sflag [#allocation7], %s355
          %s357 = sand.u32 %s75, 1
          %s358 = smul.addr %s357, 64
          %s359 = scalar_lea.vmem [#allocation6], %s358
          %s360 = smul.u32 16, %s33
          %362 = vsyncadd %s356, 0
          %s363 = smul.addr %s360, 4
          %s364 = scalar_lea.hbm %s1, %s363
          %s365 = sshll.u32 %s364, 4
          %s366 = int_to_ptr.hbm [resolvable:$true] %s365
          %s367 = sshll.u32 %s359, 4
          %s368 = int_to_ptr.vmem [resolvable:$true] %s367
          %373 = dma.hbm_to_vmem [thread:$0]  %s366, 1024, %s368, %s356, 64, 64, 4
        $region48: #{tpu_custom_call.1} parent=39 // pred_fallthru
          _
        // Predicated region
        $region49: #{tpu_custom_call.1} parent=39 // pred_check
          %p374 = pneg %p111
        $region50: #{tpu_custom_call.1} parent=39 // pred_check_branch
          %376 = sbr.rel (%p374) target = $region52
        $region51: #{tpu_custom_call.1} parent=39 // pred_region
          %s377 = sand.u32 %s25, 1
          %s378 = scalar_lea.sflag [#allocation7], %s377
          %s379 = sand.u32 %s101, 1
          %s380 = smul.addr %s379, 128
          %s381 = scalar_lea.vmem [#allocation8], %s380
          %s382 = smul.u32 16, %s32
          %384 = vsyncadd %s378, 0
          %s385 = smul.addr %s382, 8
          %s386 = scalar_lea.hbm %s2, %s385
          %s387 = sshll.u32 %s386, 4
          %s388 = int_to_ptr.hbm [resolvable:$true] %s387
          %s389 = sshll.u32 %s381, 4
          %s390 = int_to_ptr.vmem [resolvable:$true] %s389
          %395 = dma.hbm_to_vmem [thread:$0]  %s388, 2048, %s390, %s378, 128, 128, 8
        $region52: #{tpu_custom_call.1} parent=39 // pred_fallthru
          _
      $region40: #{tpu_custom_call.1} parent=5 // pred_fallthru
        _
      %p396 = scmp.le.s32.totalorder 1, %s25
      %p397 = scmp.lt.s32.totalorder %s25, 5
      %p398 = pnand %p396, %p397
      %p399 = pneg %p398
      // Predicated region
      $region53: #{tpu_custom_call.1} parent=5 // pred_check
        _
      $region54: #{tpu_custom_call.1} parent=5 // pred_check_branch
        %401 = sbr.rel (%p398) target = $region56
      $region55: #{tpu_custom_call.1} parent=5 // pred_region
        %s402 = ssub.s32 %s25, 1
        %s403 = sand.u32 %s52, 1
        %s404 = scalar_lea.sflag [#allocation4], %s403
        %s405 = sand.u32 %s52, 1
        %s406 = smul.addr %s405, 32
        %s407 = scalar_lea.vmem [#allocation3], %s406
        // Predicated region
        $region57: #{tpu_custom_call.1} parent=55 // pred_check
          %p408 = pneg %p65
        $region58: #{tpu_custom_call.1} parent=55 // pred_check_branch
          %410 = sbr.rel (%p408) target = $region60
        $region59: #{tpu_custom_call.1} parent=55 // pred_region
          %412 = dma.done %s404, 512
        $region60: #{tpu_custom_call.1} parent=55 // pred_fallthru
          _
        %s413 = sand.u32 %s30, 1
        %s414 = scalar_lea.sflag [#allocation7], %s413
        %s415 = sand.u32 %s78, 1
        %s416 = smul.addr %s415, 64
        %s417 = scalar_lea.vmem [#allocation6], %s416
        // Predicated region
        $region61: #{tpu_custom_call.1} parent=55 // pred_check
          %p418 = pneg %p91
        $region62: #{tpu_custom_call.1} parent=55 // pred_check_branch
          %420 = sbr.rel (%p418) target = $region64
        $region63: #{tpu_custom_call.1} parent=55 // pred_region
          %422 = dma.done %s414, 1024
        $region64: #{tpu_custom_call.1} parent=55 // pred_fallthru
          _
        %s423 = sand.u32 %s30, 1
        %s424 = scalar_lea.sflag [#allocation7], %s423
        %s425 = sand.u32 %s104, 1
        %s426 = smul.addr %s425, 128
        %s427 = scalar_lea.vmem [#allocation8], %s426
        // Predicated region
        $region65: #{tpu_custom_call.1} parent=55 // pred_check
          %p428 = pneg %p117
        $region66: #{tpu_custom_call.1} parent=55 // pred_check_branch
          %430 = sbr.rel (%p428) target = $region68
        $region67: #{tpu_custom_call.1} parent=55 // pred_region
          %432 = dma.done %s424, 2048
        $region68: #{tpu_custom_call.1} parent=55 // pred_fallthru
          _
        // Predicated region
        $region69: #{tpu_custom_call.1} parent=55 // pred_check
          %p433 = pneg %p138
        $region70: #{tpu_custom_call.1} parent=55 // pred_check_branch
          %435 = sbr.rel (%p433) target = $region72
        $region71: #{tpu_custom_call.1} parent=55 // pred_region
          %437 = dma.done [#allocation10], 1024
        $region72: #{tpu_custom_call.1} parent=55 // pred_fallthru
          _
        // Predicated region
        $region73: #{tpu_custom_call.1} parent=55 // pred_check
          %p438 = pneg %p180
        $region74: #{tpu_custom_call.1} parent=55 // pred_check_branch
          %440 = sbr.rel (%p438) target = $region76
        $region75: #{tpu_custom_call.1} parent=55 // pred_region
          %442 = dma.done [#allocation10], 1024
        $region76: #{tpu_custom_call.1} parent=55 // pred_fallthru
          _
        %s443 = sand.u32 %s52, 1
        %s444 = scalar_lea.sflag [#allocation4], %s443
        %s445 = sand.u32 %s52, 1
        %s446 = smul.addr %s445, 32
        %s447 = scalar_lea.vmem [#allocation3], %s446
        %p448 = pneg %p65
        %p449 = pneg %p62
        %s450 = sand.u32 %s30, 1
        %s451 = scalar_lea.sflag [#allocation7], %s450
        %s452 = sand.u32 %s78, 1
        %s453 = smul.addr %s452, 64
        %s454 = scalar_lea.vmem [#allocation6], %s453
        %p455 = pneg %p91
        %p456 = pneg %p88
        %s457 = sand.u32 %s30, 1
        %s458 = scalar_lea.sflag [#allocation7], %s457
        %s459 = sand.u32 %s104, 1
        %s460 = smul.addr %s459, 128
        %s461 = scalar_lea.vmem [#allocation8], %s460
        %p462 = pneg %p117
        %p463 = pneg %p114
        %p464 = pneg %p138
        %p465 = pneg %p135
        %p466 = pneg %p159
        %p467 = pneg %p156
        %p468 = pneg %p180
        %p469 = pneg %p177
        %p470 = pneg %p201
        %p471 = pneg %p198
        %p472 = pneg %p222
        %p473 = pneg %p219
        %p474 = pneg %p243
        %p475 = pneg %p240
        %p476 = pneg %p269
        %p477 = pneg %p266
        %s478 = sand.u32 %s256, 1
        %s479 = scalar_lea.sflag [#allocation5], %s478
        %s480 = sand.u32 %s256, 1
        %s481 = smul.addr %s480, 128
        %s482 = scalar_lea.vmem [#allocation12], %s481
        %s483 = smul.u32 4, %s34
        %s484 = smul.u32 16, %s35
        %s485 = smul.u32 16, %s34
        %s486 = smul.u32 16, %s34
        %p487 = scmp.eq.s32.totalorder %s35, 0
        // Predicated region
        $region77: #{tpu_custom_call.1} parent=55 // pred_check
          %p488 = pneg %p487
        $region78: #{tpu_custom_call.1} parent=55 // pred_check_branch
          %490 = sbr.rel (%p488) target = $region80
        $region79: #{tpu_custom_call.1} parent=55 // pred_region
          %491 = vst [vmem:[#allocation2] sm:$0xff] 0.0
          %492 = vst [vmem:[#allocation2 + $0x8] sm:$0xff] 0.0
          %493 = vst [vmem:[#allocation2 + $0x10] sm:$0xff] 0.0
          %494 = vst [vmem:[#allocation2 + $0x18] sm:$0xff] 0.0
          %495 = vst [vmem:[#allocation2 + $0x20] sm:$0xff] 0.0
          %496 = vst [vmem:[#allocation2 + $0x28] sm:$0xff] 0.0
          %497 = vst [vmem:[#allocation2 + $0x30] sm:$0xff] 0.0
          %498 = vst [vmem:[#allocation2 + $0x38] sm:$0xff] 0.0
          %499 = vst [vmem:[#allocation2 + $0x40] sm:$0xff] 0.0
          %500 = vst [vmem:[#allocation2 + $0x48] sm:$0xff] 0.0
          %501 = vst [vmem:[#allocation2 + $0x50] sm:$0xff] 0.0
          %502 = vst [vmem:[#allocation2 + $0x58] sm:$0xff] 0.0
          %503 = vst [vmem:[#allocation2 + $0x60] sm:$0xff] 0.0
          %504 = vst [vmem:[#allocation2 + $0x68] sm:$0xff] 0.0
          %505 = vst [vmem:[#allocation2 + $0x70] sm:$0xff] 0.0
          %506 = vst [vmem:[#allocation2 + $0x78] sm:$0xff] 0.0
        $region80: #{tpu_custom_call.1} parent=55 // pred_fallthru
          _
        %v507 = vld [vmem:[%s407] sm:$0xff]
        %v508 = vld [vmem:[%s407 + $0x8] sm:$0xff]
        %v509 = vld [vmem:[%s407 + $0x10] sm:$0xff]
        %v510 = vld [vmem:[%s407 + $0x18] sm:$0xff]
        %v511 = vunpack.c.0.s8 %v507
        %v512 = vunpack.c.1.s8 %v507
        %v513 = vunpack.c.2.s8 %v507
        %v514 = vunpack.c.3.s8 %v507
        %v515 = vunpack.c.0.s8 %v508
        %v516 = vunpack.c.1.s8 %v508
        %v517 = vunpack.c.2.s8 %v508
        %v518 = vunpack.c.3.s8 %v508
        %v519 = vunpack.c.0.s8 %v509
        %v520 = vunpack.c.1.s8 %v509
        %v521 = vunpack.c.2.s8 %v509
        %v522 = vunpack.c.3.s8 %v509
        %v523 = vunpack.c.0.s8 %v510
        %v524 = vunpack.c.1.s8 %v510
        %v525 = vunpack.c.2.s8 %v510
        %v526 = vunpack.c.3.s8 %v510
        %v527 = vcvt.s32.f32 %v511
        %v528 = vcvt.s32.f32 %v512
        %v529 = vcvt.s32.f32 %v513
        %v530 = vcvt.s32.f32 %v514
        %v531 = vcvt.s32.f32 %v515
        %v532 = vcvt.s32.f32 %v516
        %v533 = vcvt.s32.f32 %v517
        %v534 = vcvt.s32.f32 %v518
        %v535 = vcvt.s32.f32 %v519
        %v536 = vcvt.s32.f32 %v520
        %v537 = vcvt.s32.f32 %v521
        %v538 = vcvt.s32.f32 %v522
        %v539 = vcvt.s32.f32 %v523
        %v540 = vcvt.s32.f32 %v524
        %v541 = vcvt.s32.f32 %v525
        %v542 = vcvt.s32.f32 %v526
        %v543 = vpack.c.bf16 %v528, %v527
        %v544 = vpack.c.bf16 %v530, %v529
        %v545 = vpack.c.bf16 %v532, %v531
        %v546 = vpack.c.bf16 %v534, %v533
        %v547 = vpack.c.bf16 %v536, %v535
        %v548 = vpack.c.bf16 %v538, %v537
        %v549 = vpack.c.bf16 %v540, %v539
        %v550 = vpack.c.bf16 %v542, %v541
        %v551 = vld [vmem:[#allocation2] sm:$0xff]
        %v552 = vld [vmem:[#allocation2 + $0x8] sm:$0xff]
        %v553 = vld [vmem:[#allocation2 + $0x10] sm:$0xff]
        %v554 = vld [vmem:[#allocation2 + $0x18] sm:$0xff]
        %v555 = vld [vmem:[#allocation2 + $0x20] sm:$0xff]
        %v556 = vld [vmem:[#allocation2 + $0x28] sm:$0xff]
        %v557 = vld [vmem:[#allocation2 + $0x30] sm:$0xff]
        %v558 = vld [vmem:[#allocation2 + $0x38] sm:$0xff]
        %v559 = vld [vmem:[#allocation2 + $0x40] sm:$0xff]
        %v560 = vld [vmem:[#allocation2 + $0x48] sm:$0xff]
        %v561 = vld [vmem:[#allocation2 + $0x50] sm:$0xff]
        %v562 = vld [vmem:[#allocation2 + $0x58] sm:$0xff]
        %v563 = vld [vmem:[#allocation2 + $0x60] sm:$0xff]
        %v564 = vld [vmem:[#allocation2 + $0x68] sm:$0xff]
        %v565 = vld [vmem:[#allocation2 + $0x70] sm:$0xff]
        %v566 = vld [vmem:[#allocation2 + $0x78] sm:$0xff]
        %v567 = vld [vmem:[%s417] sm:$0xf]
        %v568 = vld [vmem:[%s417 + $0x4] sm:$0xf]
        %v569 = vld [vmem:[%s417 + $0x8] sm:$0xf]
        %v570 = vld [vmem:[%s417 + $0xc] sm:$0xf]
        %v571 = vld [vmem:[%s417 + $0x10] sm:$0xf]
        %v572 = vld [vmem:[%s417 + $0x14] sm:$0xf]
        %v573 = vld [vmem:[%s417 + $0x18] sm:$0xf]
        %v574 = vld [vmem:[%s417 + $0x1c] sm:$0xf]
        %v575 = vld [vmem:[%s417 + $0x20] sm:$0xf]
        %v576 = vld [vmem:[%s417 + $0x24] sm:$0xf]
        %v577 = vld [vmem:[%s417 + $0x28] sm:$0xf]
        %v578 = vld [vmem:[%s417 + $0x2c] sm:$0xf]
        %v579 = vld [vmem:[%s417 + $0x30] sm:$0xf]
        %v580 = vld [vmem:[%s417 + $0x34] sm:$0xf]
        %v581 = vld [vmem:[%s417 + $0x38] sm:$0xf]
        %v582 = vld [vmem:[%s417 + $0x3c] sm:$0xf]
        %v599 = vunpack.c.l.b16 %v567
        %v600 = vunpack.c.l.b16 %v568
        %v601 = vunpack.c.l.b16 %v569
        %v602 = vunpack.c.l.b16 %v570
        %v603 = vunpack.c.l.b16 %v571
        %v604 = vunpack.c.l.b16 %v572
        %v605 = vunpack.c.l.b16 %v573
        %v606 = vunpack.c.l.b16 %v574
        %v607 = vunpack.c.l.b16 %v575
        %v608 = vunpack.c.l.b16 %v576
        %v609 = vunpack.c.l.b16 %v577
        %v610 = vunpack.c.l.b16 %v578
        %v611 = vunpack.c.l.b16 %v579
        %v612 = vunpack.c.l.b16 %v580
        %v613 = vunpack.c.l.b16 %v581
        %v614 = vunpack.c.l.b16 %v582
        %v615 = vpack.c.b16 %v600, %v599
        %v616 = vpack.c.b16 %v602, %v601
        %v617 = vpack.c.b16 %v604, %v603
        %v618 = vpack.c.b16 %v606, %v605
        %v619 = vpack.c.b16 %v608, %v607
        %v620 = vpack.c.b16 %v610, %v609
        %v621 = vpack.c.b16 %v612, %v611
        %v622 = vpack.c.b16 %v614, %v613
        %631 = vmatpush.bf16.msra.mxu0 %v622
        %632 = vmatpush.bf16.msra.mxu0 %v621
        %633 = vmatpush.bf16.msra.mxu0 %v620
        %634 = vmatpush.bf16.msra.mxu0 %v619
        %635 = vmatpush.bf16.msra.mxu0 %v618
        %636 = vmatpush.bf16.msra.mxu0 %v617
        %637 = vmatpush.bf16.msra.mxu0 %v616
        %638 = vmatpush.bf16.msra.mxu0 %v615
        %639 = vmatmul.bf16.gmra.mxu0 %v543
        %v640 = vpop.f32.mrf.mxu0
        %v641 = vadd.f32 0.0, %v640
        %v642 = vpop.f32.mrf.mxu0
        %v643 = vadd.f32 0.0, %v642
        %644 = vmatmul.bf16.gmra.mxu0 %v544
        %v645 = vpop.f32.mrf.mxu0
        %v646 = vadd.f32 0.0, %v645
        %v647 = vpop.f32.mrf.mxu0
        %v648 = vadd.f32 0.0, %v647
        %649 = vmatmul.bf16.gmra.mxu0 %v545
        %v650 = vpop.f32.mrf.mxu0
        %v651 = vadd.f32 0.0, %v650
        %v652 = vpop.f32.mrf.mxu0
        %v653 = vadd.f32 0.0, %v652
        %654 = vmatmul.bf16.gmra.mxu0 %v546
        %v655 = vpop.f32.mrf.mxu0
        %v656 = vadd.f32 0.0, %v655
        %v657 = vpop.f32.mrf.mxu0
        %v658 = vadd.f32 0.0, %v657
        %659 = vmatmul.bf16.gmra.mxu0 %v547
        %v660 = vpop.f32.mrf.mxu0
        %v661 = vadd.f32 0.0, %v660
        %v662 = vpop.f32.mrf.mxu0
        %v663 = vadd.f32 0.0, %v662
        %664 = vmatmul.bf16.gmra.mxu0 %v548
        %v665 = vpop.f32.mrf.mxu0
        %v666 = vadd.f32 0.0, %v665
        %v667 = vpop.f32.mrf.mxu0
        %v668 = vadd.f32 0.0, %v667
        %669 = vmatmul.bf16.gmra.mxu0 %v549
        %v670 = vpop.f32.mrf.mxu0
        %v671 = vadd.f32 0.0, %v670
        %v672 = vpop.f32.mrf.mxu0
        %v673 = vadd.f32 0.0, %v672
        %674 = vmatmul.bf16.gmra.mxu0 %v550
        %v675 = vpop.f32.mrf.mxu0
        %v676 = vadd.f32 0.0, %v675
        %v677 = vpop.f32.mrf.mxu0
        %v678 = vadd.f32 0.0, %v677
        %679 = vdwg.mxu0
        %v680 = vadd.f32 %v551, %v641
        %v681 = vadd.f32 %v552, %v643
        %v682 = vadd.f32 %v553, %v646
        %v683 = vadd.f32 %v554, %v648
        %v684 = vadd.f32 %v555, %v651
        %v685 = vadd.f32 %v556, %v653
        %v686 = vadd.f32 %v557, %v656
        %v687 = vadd.f32 %v558, %v658
        %v688 = vadd.f32 %v559, %v661
        %v689 = vadd.f32 %v560, %v663
        %v690 = vadd.f32 %v561, %v666
        %v691 = vadd.f32 %v562, %v668
        %v692 = vadd.f32 %v563, %v671
        %v693 = vadd.f32 %v564, %v673
        %v694 = vadd.f32 %v565, %v676
        %v695 = vadd.f32 %v566, %v678
        %696 = vst [vmem:[#allocation2] sm:$0xff] %v680
        %697 = vst [vmem:[#allocation2 + $0x8] sm:$0xff] %v681
        %698 = vst [vmem:[#allocation2 + $0x10] sm:$0xff] %v682
        %699 = vst [vmem:[#allocation2 + $0x18] sm:$0xff] %v683
        %700 = vst [vmem:[#allocation2 + $0x20] sm:$0xff] %v684
        %701 = vst [vmem:[#allocation2 + $0x28] sm:$0xff] %v685
        %702 = vst [vmem:[#allocation2 + $0x30] sm:$0xff] %v686
        %703 = vst [vmem:[#allocation2 + $0x38] sm:$0xff] %v687
        %704 = vst [vmem:[#allocation2 + $0x40] sm:$0xff] %v688
        %705 = vst [vmem:[#allocation2 + $0x48] sm:$0xff] %v689
        %706 = vst [vmem:[#allocation2 + $0x50] sm:$0xff] %v690
        %707 = vst [vmem:[#allocation2 + $0x58] sm:$0xff] %v691
        %708 = vst [vmem:[#allocation2 + $0x60] sm:$0xff] %v692
        %709 = vst [vmem:[#allocation2 + $0x68] sm:$0xff] %v693
        %710 = vst [vmem:[#allocation2 + $0x70] sm:$0xff] %v694
        %711 = vst [vmem:[#allocation2 + $0x78] sm:$0xff] %v695
        %p712 = scmp.eq.s32.totalorder %s35, 1
        // Predicated region
        $region81: #{tpu_custom_call.1} parent=55 // pred_check
          %p713 = pneg %p712
        $region82: #{tpu_custom_call.1} parent=55 // pred_check_branch
          %715 = sbr.rel (%p713) target = $region84
        $region83: #{tpu_custom_call.1} parent=55 // pred_region
          %v716 = vld [vmem:[#allocation2] sm:$0xff]
          %v717 = vld [vmem:[#allocation2 + $0x8] sm:$0xff]
          %v718 = vld [vmem:[#allocation2 + $0x10] sm:$0xff]
          %v719 = vld [vmem:[#allocation2 + $0x18] sm:$0xff]
          %v720 = vld [vmem:[#allocation2 + $0x20] sm:$0xff]
          %v721 = vld [vmem:[#allocation2 + $0x28] sm:$0xff]
          %v722 = vld [vmem:[#allocation2 + $0x30] sm:$0xff]
          %v723 = vld [vmem:[#allocation2 + $0x38] sm:$0xff]
          %v724 = vld [vmem:[#allocation2 + $0x40] sm:$0xff]
          %v725 = vld [vmem:[#allocation2 + $0x48] sm:$0xff]
          %v726 = vld [vmem:[#allocation2 + $0x50] sm:$0xff]
          %v727 = vld [vmem:[#allocation2 + $0x58] sm:$0xff]
          %v728 = vld [vmem:[#allocation2 + $0x60] sm:$0xff]
          %v729 = vld [vmem:[#allocation2 + $0x68] sm:$0xff]
          %v730 = vld [vmem:[#allocation2 + $0x70] sm:$0xff]
          %v731 = vld [vmem:[#allocation2 + $0x78] sm:$0xff]
          %v732 = vpack.c.bf16 %v717, %v716
          %v733 = vpack.c.bf16 %v719, %v718
          %v734 = vpack.c.bf16 %v721, %v720
          %v735 = vpack.c.bf16 %v723, %v722
          %v736 = vpack.c.bf16 %v725, %v724
          %v737 = vpack.c.bf16 %v727, %v726
          %v738 = vpack.c.bf16 %v729, %v728
          %v739 = vpack.c.bf16 %v731, %v730
          %v740 = vld [vmem:[#allocation9] sm:$0xf]
          %v741 = vld [vmem:[#allocation9 + $0x4] sm:$0xf]
          %v742 = vld [vmem:[#allocation9 + $0x8] sm:$0xf]
          %v743 = vld [vmem:[#allocation9 + $0xc] sm:$0xf]
          %v744 = vld [vmem:[#allocation9 + $0x10] sm:$0xf]
          %v745 = vld [vmem:[#allocation9 + $0x14] sm:$0xf]
          %v746 = vld [vmem:[#allocation9 + $0x18] sm:$0xf]
          %v747 = vld [vmem:[#allocation9 + $0x1c] sm:$0xf]
          %v748 = vld [vmem:[#allocation9 + $0x20] sm:$0xf]
          %v749 = vld [vmem:[#allocation9 + $0x24] sm:$0xf]
          %v750 = vld [vmem:[#allocation9 + $0x28] sm:$0xf]
          %v751 = vld [vmem:[#allocation9 + $0x2c] sm:$0xf]
          %v752 = vld [vmem:[#allocation9 + $0x30] sm:$0xf]
          %v753 = vld [vmem:[#allocation9 + $0x34] sm:$0xf]
          %v754 = vld [vmem:[#allocation9 + $0x38] sm:$0xf]
          %v755 = vld [vmem:[#allocation9 + $0x3c] sm:$0xf]
          %v756 = vld [vmem:[%s4] sm:$0x1]
          %v758 = vperm.slane %v756, 0
          %v776 = vunpack.c.l.b16 %v740
          %v777 = vunpack.c.l.b16 %v741
          %v778 = vunpack.c.l.b16 %v742
          %v779 = vunpack.c.l.b16 %v743
          %v780 = vunpack.c.l.b16 %v744
          %v781 = vunpack.c.l.b16 %v745
          %v782 = vunpack.c.l.b16 %v746
          %v783 = vunpack.c.l.b16 %v747
          %v784 = vunpack.c.l.b16 %v748
          %v785 = vunpack.c.l.b16 %v749
          %v786 = vunpack.c.l.b16 %v750
          %v787 = vunpack.c.l.b16 %v751
          %v788 = vunpack.c.l.b16 %v752
          %v789 = vunpack.c.l.b16 %v753
          %v790 = vunpack.c.l.b16 %v754
          %v791 = vunpack.c.l.b16 %v755
          %v792 = vpack.c.b16 %v777, %v776
          %v793 = vpack.c.b16 %v779, %v778
          %v794 = vpack.c.b16 %v781, %v780
          %v795 = vpack.c.b16 %v783, %v782
          %v796 = vpack.c.b16 %v785, %v784
          %v797 = vpack.c.b16 %v787, %v786
          %v798 = vpack.c.b16 %v789, %v788
          %v799 = vpack.c.b16 %v791, %v790
          %808 = vmatpush.bf16.msra.mxu0 %v799
          %809 = vmatpush.bf16.msra.mxu0 %v798
          %810 = vmatpush.bf16.msra.mxu0 %v797
          %811 = vmatpush.bf16.msra.mxu0 %v796
          %812 = vmatpush.bf16.msra.mxu0 %v795
          %813 = vmatpush.bf16.msra.mxu0 %v794
          %814 = vmatpush.bf16.msra.mxu0 %v793
          %815 = vmatpush.bf16.msra.mxu0 %v792
          %816 = vmatmul.bf16.gmra.mxu0 %v732
          %v817 = vpop.f32.mrf.mxu0
          %v818 = vadd.f32 %v758, %v817
          %v819 = vpop.f32.mrf.mxu0
          %v820 = vadd.f32 %v758, %v819
          %821 = vmatmul.bf16.gmra.mxu0 %v733
          %v822 = vpop.f32.mrf.mxu0
          %v823 = vadd.f32 %v758, %v822
          %v824 = vpop.f32.mrf.mxu0
          %v825 = vadd.f32 %v758, %v824
          %826 = vmatmul.bf16.gmra.mxu0 %v734
          %v827 = vpop.f32.mrf.mxu0
          %v828 = vadd.f32 %v758, %v827
          %v829 = vpop.f32.mrf.mxu0
          %v830 = vadd.f32 %v758, %v829
          %831 = vmatmul.bf16.gmra.mxu0 %v735
          %v832 = vpop.f32.mrf.mxu0
          %v833 = vadd.f32 %v758, %v832
          %v834 = vpop.f32.mrf.mxu0
          %v835 = vadd.f32 %v758, %v834
          %836 = vmatmul.bf16.gmra.mxu0 %v736
          %v837 = vpop.f32.mrf.mxu0
          %v838 = vadd.f32 %v758, %v837
          %v839 = vpop.f32.mrf.mxu0
          %v840 = vadd.f32 %v758, %v839
          %841 = vmatmul.bf16.gmra.mxu0 %v737
          %v842 = vpop.f32.mrf.mxu0
          %v843 = vadd.f32 %v758, %v842
          %v844 = vpop.f32.mrf.mxu0
          %v845 = vadd.f32 %v758, %v844
          %846 = vmatmul.bf16.gmra.mxu0 %v738
          %v847 = vpop.f32.mrf.mxu0
          %v848 = vadd.f32 %v758, %v847
          %v849 = vpop.f32.mrf.mxu0
          %v850 = vadd.f32 %v758, %v849
          %851 = vmatmul.bf16.gmra.mxu0 %v739
          %v852 = vpop.f32.mrf.mxu0
          %v853 = vadd.f32 %v758, %v852
          %v854 = vpop.f32.mrf.mxu0
          %v855 = vadd.f32 %v758, %v854
          %856 = vdwg.mxu0
          %v857 = vmax.f32 %v818, 0.0
          %v858 = vmax.f32 %v820, 0.0
          %v859 = vmax.f32 %v823, 0.0
          %v860 = vmax.f32 %v825, 0.0
          %v861 = vmax.f32 %v828, 0.0
          %v862 = vmax.f32 %v830, 0.0
          %v863 = vmax.f32 %v833, 0.0
          %v864 = vmax.f32 %v835, 0.0
          %v865 = vmax.f32 %v838, 0.0
          %v866 = vmax.f32 %v840, 0.0
          %v867 = vmax.f32 %v843, 0.0
          %v868 = vmax.f32 %v845, 0.0
          %v869 = vmax.f32 %v848, 0.0
          %v870 = vmax.f32 %v850, 0.0
          %v871 = vmax.f32 %v853, 0.0
          %v872 = vmax.f32 %v855, 0.0
          %v873 = vpack.c.bf16 %v858, %v857
          %v874 = vpack.c.bf16 %v860, %v859
          %v875 = vpack.c.bf16 %v862, %v861
          %v876 = vpack.c.bf16 %v864, %v863
          %v877 = vpack.c.bf16 %v866, %v865
          %v878 = vpack.c.bf16 %v868, %v867
          %v879 = vpack.c.bf16 %v870, %v869
          %v880 = vpack.c.bf16 %v872, %v871
          %v881 = vld [vmem:[#allocation11] sm:$0xf]
          %v882 = vld [vmem:[#allocation11 + $0x4] sm:$0xf]
          %v883 = vld [vmem:[#allocation11 + $0x8] sm:$0xf]
          %v884 = vld [vmem:[#allocation11 + $0xc] sm:$0xf]
          %v885 = vld [vmem:[#allocation11 + $0x10] sm:$0xf]
          %v886 = vld [vmem:[#allocation11 + $0x14] sm:$0xf]
          %v887 = vld [vmem:[#allocation11 + $0x18] sm:$0xf]
          %v888 = vld [vmem:[#allocation11 + $0x1c] sm:$0xf]
          %v889 = vld [vmem:[#allocation11 + $0x20] sm:$0xf]
          %v890 = vld [vmem:[#allocation11 + $0x24] sm:$0xf]
          %v891 = vld [vmem:[#allocation11 + $0x28] sm:$0xf]
          %v892 = vld [vmem:[#allocation11 + $0x2c] sm:$0xf]
          %v893 = vld [vmem:[#allocation11 + $0x30] sm:$0xf]
          %v894 = vld [vmem:[#allocation11 + $0x34] sm:$0xf]
          %v895 = vld [vmem:[#allocation11 + $0x38] sm:$0xf]
          %v896 = vld [vmem:[#allocation11 + $0x3c] sm:$0xf]
          %v897 = vld [vmem:[%s6] sm:$0x1]
          %v899 = vperm.slane %v897, 0
          %v917 = vunpack.c.l.b16 %v881
          %v918 = vunpack.c.l.b16 %v882
          %v919 = vunpack.c.l.b16 %v883
          %v920 = vunpack.c.l.b16 %v884
          %v921 = vunpack.c.l.b16 %v885
          %v922 = vunpack.c.l.b16 %v886
          %v923 = vunpack.c.l.b16 %v887
          %v924 = vunpack.c.l.b16 %v888
          %v925 = vunpack.c.l.b16 %v889
          %v926 = vunpack.c.l.b16 %v890
          %v927 = vunpack.c.l.b16 %v891
          %v928 = vunpack.c.l.b16 %v892
          %v929 = vunpack.c.l.b16 %v893
          %v930 = vunpack.c.l.b16 %v894
          %v931 = vunpack.c.l.b16 %v895
          %v932 = vunpack.c.l.b16 %v896
          %v933 = vpack.c.b16 %v918, %v917
          %v934 = vpack.c.b16 %v920, %v919
          %v935 = vpack.c.b16 %v922, %v921
          %v936 = vpack.c.b16 %v924, %v923
          %v937 = vpack.c.b16 %v926, %v925
          %v938 = vpack.c.b16 %v928, %v927
          %v939 = vpack.c.b16 %v930, %v929
          %v940 = vpack.c.b16 %v932, %v931
          %949 = vmatpush.bf16.msra.mxu0 %v940
          %950 = vmatpush.bf16.msra.mxu0 %v939
          %951 = vmatpush.bf16.msra.mxu0 %v938
          %952 = vmatpush.bf16.msra.mxu0 %v937
          %953 = vmatpush.bf16.msra.mxu0 %v936
          %954 = vmatpush.bf16.msra.mxu0 %v935
          %955 = vmatpush.bf16.msra.mxu0 %v934
          %956 = vmatpush.bf16.msra.mxu0 %v933
          %957 = vmatmul.bf16.gmra.mxu0 %v873
          %v958 = vpop.f32.mrf.mxu0
          %v959 = vadd.f32 %v899, %v958
          %v960 = vpop.f32.mrf.mxu0
          %v961 = vadd.f32 %v899, %v960
          %962 = vmatmul.bf16.gmra.mxu0 %v874
          %v963 = vpop.f32.mrf.mxu0
          %v964 = vadd.f32 %v899, %v963
          %v965 = vpop.f32.mrf.mxu0
          %v966 = vadd.f32 %v899, %v965
          %967 = vmatmul.bf16.gmra.mxu0 %v875
          %v968 = vpop.f32.mrf.mxu0
          %v969 = vadd.f32 %v899, %v968
          %v970 = vpop.f32.mrf.mxu0
          %v971 = vadd.f32 %v899, %v970
          %972 = vmatmul.bf16.gmra.mxu0 %v876
          %v973 = vpop.f32.mrf.mxu0
          %v974 = vadd.f32 %v899, %v973
          %v975 = vpop.f32.mrf.mxu0
          %v976 = vadd.f32 %v899, %v975
          %977 = vmatmul.bf16.gmra.mxu0 %v877
          %v978 = vpop.f32.mrf.mxu0
          %v979 = vadd.f32 %v899, %v978
          %v980 = vpop.f32.mrf.mxu0
          %v981 = vadd.f32 %v899, %v980
          %982 = vmatmul.bf16.gmra.mxu0 %v878
          %v983 = vpop.f32.mrf.mxu0
          %v984 = vadd.f32 %v899, %v983
          %v985 = vpop.f32.mrf.mxu0
          %v986 = vadd.f32 %v899, %v985
          %987 = vmatmul.bf16.gmra.mxu0 %v879
          %v988 = vpop.f32.mrf.mxu0
          %v989 = vadd.f32 %v899, %v988
          %v990 = vpop.f32.mrf.mxu0
          %v991 = vadd.f32 %v899, %v990
          %992 = vmatmul.bf16.gmra.mxu0 %v880
          %v993 = vpop.f32.mrf.mxu0
          %v994 = vadd.f32 %v899, %v993
          %v995 = vpop.f32.mrf.mxu0
          %v996 = vadd.f32 %v899, %v995
          %997 = vdwg.mxu0
          %v998 = vld [vmem:[%s427] sm:$0xff]
          %v999 = vld [vmem:[%s427 + $0x8] sm:$0xff]
          %v1000 = vld [vmem:[%s427 + $0x10] sm:$0xff]
          %v1001 = vld [vmem:[%s427 + $0x18] sm:$0xff]
          %v1002 = vld [vmem:[%s427 + $0x20] sm:$0xff]
          %v1003 = vld [vmem:[%s427 + $0x28] sm:$0xff]
          %v1004 = vld [vmem:[%s427 + $0x30] sm:$0xff]
          %v1005 = vld [vmem:[%s427 + $0x38] sm:$0xff]
          %v1006 = vld [vmem:[%s427 + $0x40] sm:$0xff]
          %v1007 = vld [vmem:[%s427 + $0x48] sm:$0xff]
          %v1008 = vld [vmem:[%s427 + $0x50] sm:$0xff]
          %v1009 = vld [vmem:[%s427 + $0x58] sm:$0xff]
          %v1010 = vld [vmem:[%s427 + $0x60] sm:$0xff]
          %v1011 = vld [vmem:[%s427 + $0x68] sm:$0xff]
          %v1012 = vld [vmem:[%s427 + $0x70] sm:$0xff]
          %v1013 = vld [vmem:[%s427 + $0x78] sm:$0xff]
          %v1014 = vadd.f32 %v959, %v998
          %v1015 = vadd.f32 %v961, %v999
          %v1016 = vadd.f32 %v964, %v1000
          %v1017 = vadd.f32 %v966, %v1001
          %v1018 = vadd.f32 %v969, %v1002
          %v1019 = vadd.f32 %v971, %v1003
          %v1020 = vadd.f32 %v974, %v1004
          %v1021 = vadd.f32 %v976, %v1005
          %v1022 = vadd.f32 %v979, %v1006
          %v1023 = vadd.f32 %v981, %v1007
          %v1024 = vadd.f32 %v984, %v1008
          %v1025 = vadd.f32 %v986, %v1009
          %v1026 = vadd.f32 %v989, %v1010
          %v1027 = vadd.f32 %v991, %v1011
          %v1028 = vadd.f32 %v994, %v1012
          %v1029 = vadd.f32 %v996, %v1013
          %1030 = vadd.xlane.f32.xlu0 %v1014
          %v1031 = vpop.xlane.xlu0 %1030
          %1032 = vadd.xlane.f32.xlu0 %v1015
          %v1033 = vpop.xlane.xlu0 %1032
          %1034 = vadd.xlane.f32.xlu0 %v1016
          %v1035 = vpop.xlane.xlu0 %1034
          %1036 = vadd.xlane.f32.xlu0 %v1017
          %v1037 = vpop.xlane.xlu0 %1036
          %1038 = vadd.xlane.f32.xlu0 %v1018
          %v1039 = vpop.xlane.xlu0 %1038
          %1040 = vadd.xlane.f32.xlu0 %v1019
          %v1041 = vpop.xlane.xlu0 %1040
          %1042 = vadd.xlane.f32.xlu0 %v1020
          %v1043 = vpop.xlane.xlu0 %1042
          %1044 = vadd.xlane.f32.xlu0 %v1021
          %v1045 = vpop.xlane.xlu0 %1044
          %1046 = vadd.xlane.f32.xlu0 %v1022
          %v1047 = vpop.xlane.xlu0 %1046
          %1048 = vadd.xlane.f32.xlu0 %v1023
          %v1049 = vpop.xlane.xlu0 %1048
          %1050 = vadd.xlane.f32.xlu0 %v1024
          %v1051 = vpop.xlane.xlu0 %1050
          %1052 = vadd.xlane.f32.xlu0 %v1025
          %v1053 = vpop.xlane.xlu0 %1052
          %1054 = vadd.xlane.f32.xlu0 %v1026
          %v1055 = vpop.xlane.xlu0 %1054
          %1056 = vadd.xlane.f32.xlu0 %v1027
          %v1057 = vpop.xlane.xlu0 %1056
          %1058 = vadd.xlane.f32.xlu0 %v1028
          %v1059 = vpop.xlane.xlu0 %1058
          %1060 = vadd.xlane.f32.xlu0 %v1029
          %v1061 = vpop.xlane.xlu0 %1060
          %v1062 = vmul.f32 %v1031, 0.03125
          %v1063 = vmul.f32 %v1033, 0.03125
          %v1064 = vmul.f32 %v1035, 0.03125
          %v1065 = vmul.f32 %v1037, 0.03125
          %v1066 = vmul.f32 %v1039, 0.03125
          %v1067 = vmul.f32 %v1041, 0.03125
          %v1068 = vmul.f32 %v1043, 0.03125
          %v1069 = vmul.f32 %v1045, 0.03125
          %v1070 = vmul.f32 %v1047, 0.03125
          %v1071 = vmul.f32 %v1049, 0.03125
          %v1072 = vmul.f32 %v1051, 0.03125
          %v1073 = vmul.f32 %v1053, 0.03125
          %v1074 = vmul.f32 %v1055, 0.03125
          %v1075 = vmul.f32 %v1057, 0.03125
          %v1076 = vmul.f32 %v1059, 0.03125
          %v1077 = vmul.f32 %v1061, 0.03125
          %v1078 = vlaneseq
          %v1079 = vand.u32 %v1078, 127
          %vm1080 = vcmp.lt.s32.totalorder %v1079, 32
          %v1081 = vsub.f32 %v1014, %v1062
          %v1082 = vsub.f32 %v1015, %v1063
          %v1083 = vsub.f32 %v1016, %v1064
          %v1084 = vsub.f32 %v1017, %v1065
          %v1085 = vsub.f32 %v1018, %v1066
          %v1086 = vsub.f32 %v1019, %v1067
          %v1087 = vsub.f32 %v1020, %v1068
          %v1088 = vsub.f32 %v1021, %v1069
          %v1089 = vsub.f32 %v1022, %v1070
          %v1090 = vsub.f32 %v1023, %v1071
          %v1091 = vsub.f32 %v1024, %v1072
          %v1092 = vsub.f32 %v1025, %v1073
          %v1093 = vsub.f32 %v1026, %v1074
          %v1094 = vsub.f32 %v1027, %v1075
          %v1095 = vsub.f32 %v1028, %v1076
          %v1096 = vsub.f32 %v1029, %v1077
          %v1097 = vsel %vm1080, %v1081, 0.0
          %v1098 = vsel %vm1080, %v1082, 0.0
          %v1099 = vsel %vm1080, %v1083, 0.0
          %v1100 = vsel %vm1080, %v1084, 0.0
          %v1101 = vsel %vm1080, %v1085, 0.0
          %v1102 = vsel %vm1080, %v1086, 0.0
          %v1103 = vsel %vm1080, %v1087, 0.0
          %v1104 = vsel %vm1080, %v1088, 0.0
          %v1105 = vsel %vm1080, %v1089, 0.0
          %v1106 = vsel %vm1080, %v1090, 0.0
          %v1107 = vsel %vm1080, %v1091, 0.0
          %v1108 = vsel %vm1080, %v1092, 0.0
          %v1109 = vsel %vm1080, %v1093, 0.0
          %v1110 = vsel %vm1080, %v1094, 0.0
          %v1111 = vsel %vm1080, %v1095, 0.0
          %v1112 = vsel %vm1080, %v1096, 0.0
          %v1113 = vmul.f32 %v1097, %v1097
          %v1114 = vmul.f32 %v1098, %v1098
          %v1115 = vmul.f32 %v1099, %v1099
          %v1116 = vmul.f32 %v1100, %v1100
          %v1117 = vmul.f32 %v1101, %v1101
          %v1118 = vmul.f32 %v1102, %v1102
          %v1119 = vmul.f32 %v1103, %v1103
          %v1120 = vmul.f32 %v1104, %v1104
          %v1121 = vmul.f32 %v1105, %v1105
          %v1122 = vmul.f32 %v1106, %v1106
          %v1123 = vmul.f32 %v1107, %v1107
          %v1124 = vmul.f32 %v1108, %v1108
          %v1125 = vmul.f32 %v1109, %v1109
          %v1126 = vmul.f32 %v1110, %v1110
          %v1127 = vmul.f32 %v1111, %v1111
          %v1128 = vmul.f32 %v1112, %v1112
          %1129 = vadd.xlane.f32.xlu0 %v1113
          %v1130 = vpop.xlane.xlu0 %1129
          %1131 = vadd.xlane.f32.xlu0 %v1114
          %v1132 = vpop.xlane.xlu0 %1131
          %1133 = vadd.xlane.f32.xlu0 %v1115
          %v1134 = vpop.xlane.xlu0 %1133
          %1135 = vadd.xlane.f32.xlu0 %v1116
          %v1136 = vpop.xlane.xlu0 %1135
          %1137 = vadd.xlane.f32.xlu0 %v1117
          %v1138 = vpop.xlane.xlu0 %1137
          %1139 = vadd.xlane.f32.xlu0 %v1118
          %v1140 = vpop.xlane.xlu0 %1139
          %1141 = vadd.xlane.f32.xlu0 %v1119
          %v1142 = vpop.xlane.xlu0 %1141
          %1143 = vadd.xlane.f32.xlu0 %v1120
          %v1144 = vpop.xlane.xlu0 %1143
          %1145 = vadd.xlane.f32.xlu0 %v1121
          %v1146 = vpop.xlane.xlu0 %1145
          %1147 = vadd.xlane.f32.xlu0 %v1122
          %v1148 = vpop.xlane.xlu0 %1147
          %1149 = vadd.xlane.f32.xlu0 %v1123
          %v1150 = vpop.xlane.xlu0 %1149
          %1151 = vadd.xlane.f32.xlu0 %v1124
          %v1152 = vpop.xlane.xlu0 %1151
          %1153 = vadd.xlane.f32.xlu0 %v1125
          %v1154 = vpop.xlane.xlu0 %1153
          %1155 = vadd.xlane.f32.xlu0 %v1126
          %v1156 = vpop.xlane.xlu0 %1155
          %1157 = vadd.xlane.f32.xlu0 %v1127
          %v1158 = vpop.xlane.xlu0 %1157
          %1159 = vadd.xlane.f32.xlu0 %v1128
          %v1160 = vpop.xlane.xlu0 %1159
          %v1161 = vmul.f32 %v1130, 0.03125
          %v1162 = vmul.f32 %v1132, 0.03125
          %v1163 = vmul.f32 %v1134, 0.03125
          %v1164 = vmul.f32 %v1136, 0.03125
          %v1165 = vmul.f32 %v1138, 0.03125
          %v1166 = vmul.f32 %v1140, 0.03125
          %v1167 = vmul.f32 %v1142, 0.03125
          %v1168 = vmul.f32 %v1144, 0.03125
          %v1169 = vmul.f32 %v1146, 0.03125
          %v1170 = vmul.f32 %v1148, 0.03125
          %v1171 = vmul.f32 %v1150, 0.03125
          %v1172 = vmul.f32 %v1152, 0.03125
          %v1173 = vmul.f32 %v1154, 0.03125
          %v1174 = vmul.f32 %v1156, 0.03125
          %v1175 = vmul.f32 %v1158, 0.03125
          %v1176 = vmul.f32 %v1160, 0.03125
          %v1177 = vadd.f32 %v1161, 1e-05
          %v1178 = vadd.f32 %v1162, 1e-05
          %v1179 = vadd.f32 %v1163, 1e-05
          %v1180 = vadd.f32 %v1164, 1e-05
          %v1181 = vadd.f32 %v1165, 1e-05
          %v1182 = vadd.f32 %v1166, 1e-05
          %v1183 = vadd.f32 %v1167, 1e-05
          %v1184 = vadd.f32 %v1168, 1e-05
          %v1185 = vadd.f32 %v1169, 1e-05
          %v1186 = vadd.f32 %v1170, 1e-05
          %v1187 = vadd.f32 %v1171, 1e-05
          %v1188 = vadd.f32 %v1172, 1e-05
          %v1189 = vadd.f32 %v1173, 1e-05
          %v1190 = vadd.f32 %v1174, 1e-05
          %v1191 = vadd.f32 %v1175, 1e-05
          %v1192 = vadd.f32 %v1176, 1e-05
          %v1193 = vrsqrt.pop %v1177
          %v1194 = vmul.f32 %v1193, %v1177
          %v1195 = vmul.f32 %v1194, %v1193
          %v1196 = vmul.f32 0.5, %v1195
          %v1197 = vsub.f32 1.5, %v1196
          %v1198 = vmul.f32 %v1193, %v1197
          %vm1199 = vweird.f32 %v1177
          %vm1200 = vweird.f32 %v1193
          %vm1201 = vmor %vm1199, %vm1200
          %v1202 = vsel %vm1201, %v1193, %v1198
          %v1203 = vrsqrt.pop %v1178
          %v1204 = vmul.f32 %v1203, %v1178
          %v1205 = vmul.f32 %v1204, %v1203
          %v1206 = vmul.f32 0.5, %v1205
          %v1207 = vsub.f32 1.5, %v1206
          %v1208 = vmul.f32 %v1203, %v1207
          %vm1209 = vweird.f32 %v1178
          %vm1210 = vweird.f32 %v1203
          %vm1211 = vmor %vm1209, %vm1210
          %v1212 = vsel %vm1211, %v1203, %v1208
          %v1213 = vrsqrt.pop %v1179
          %v1214 = vmul.f32 %v1213, %v1179
          %v1215 = vmul.f32 %v1214, %v1213
          %v1216 = vmul.f32 0.5, %v1215
          %v1217 = vsub.f32 1.5, %v1216
          %v1218 = vmul.f32 %v1213, %v1217
          %vm1219 = vweird.f32 %v1179
          %vm1220 = vweird.f32 %v1213
          %vm1221 = vmor %vm1219, %vm1220
          %v1222 = vsel %vm1221, %v1213, %v1218
          %v1223 = vrsqrt.pop %v1180
          %v1224 = vmul.f32 %v1223, %v1180
          %v1225 = vmul.f32 %v1224, %v1223
          %v1226 = vmul.f32 0.5, %v1225
          %v1227 = vsub.f32 1.5, %v1226
          %v1228 = vmul.f32 %v1223, %v1227
          %vm1229 = vweird.f32 %v1180
          %vm1230 = vweird.f32 %v1223
          %vm1231 = vmor %vm1229, %vm1230
          %v1232 = vsel %vm1231, %v1223, %v1228
          %v1233 = vrsqrt.pop %v1181
          %v1234 = vmul.f32 %v1233, %v1181
          %v1235 = vmul.f32 %v1234, %v1233
          %v1236 = vmul.f32 0.5, %v1235
          %v1237 = vsub.f32 1.5, %v1236
          %v1238 = vmul.f32 %v1233, %v1237
          %vm1239 = vweird.f32 %v1181
          %vm1240 = vweird.f32 %v1233
          %vm1241 = vmor %vm1239, %vm1240
          %v1242 = vsel %vm1241, %v1233, %v1238
          %v1243 = vrsqrt.pop %v1182
          %v1244 = vmul.f32 %v1243, %v1182
          %v1245 = vmul.f32 %v1244, %v1243
          %v1246 = vmul.f32 0.5, %v1245
          %v1247 = vsub.f32 1.5, %v1246
          %v1248 = vmul.f32 %v1243, %v1247
          %vm1249 = vweird.f32 %v1182
          %vm1250 = vweird.f32 %v1243
          %vm1251 = vmor %vm1249, %vm1250
          %v1252 = vsel %vm1251, %v1243, %v1248
          %v1253 = vrsqrt.pop %v1183
          %v1254 = vmul.f32 %v1253, %v1183
          %v1255 = vmul.f32 %v1254, %v1253
          %v1256 = vmul.f32 0.5, %v1255
          %v1257 = vsub.f32 1.5, %v1256
          %v1258 = vmul.f32 %v1253, %v1257
          %vm1259 = vweird.f32 %v1183
          %vm1260 = vweird.f32 %v1253
          %vm1261 = vmor %vm1259, %vm1260
          %v1262 = vsel %vm1261, %v1253, %v1258
          %v1263 = vrsqrt.pop %v1184
          %v1264 = vmul.f32 %v1263, %v1184
          %v1265 = vmul.f32 %v1264, %v1263
          %v1266 = vmul.f32 0.5, %v1265
          %v1267 = vsub.f32 1.5, %v1266
          %v1268 = vmul.f32 %v1263, %v1267
          %vm1269 = vweird.f32 %v1184
          %vm1270 = vweird.f32 %v1263
          %vm1271 = vmor %vm1269, %vm1270
          %v1272 = vsel %vm1271, %v1263, %v1268
          %v1273 = vrsqrt.pop %v1185
          %v1274 = vmul.f32 %v1273, %v1185
          %v1275 = vmul.f32 %v1274, %v1273
          %v1276 = vmul.f32 0.5, %v1275
          %v1277 = vsub.f32 1.5, %v1276
          %v1278 = vmul.f32 %v1273, %v1277
          %vm1279 = vweird.f32 %v1185
          %vm1280 = vweird.f32 %v1273
          %vm1281 = vmor %vm1279, %vm1280
          %v1282 = vsel %vm1281, %v1273, %v1278
          %v1283 = vrsqrt.pop %v1186
          %v1284 = vmul.f32 %v1283, %v1186
          %v1285 = vmul.f32 %v1284, %v1283
          %v1286 = vmul.f32 0.5, %v1285
          %v1287 = vsub.f32 1.5, %v1286
          %v1288 = vmul.f32 %v1283, %v1287
          %vm1289 = vweird.f32 %v1186
          %vm1290 = vweird.f32 %v1283
          %vm1291 = vmor %vm1289, %vm1290
          %v1292 = vsel %vm1291, %v1283, %v1288
          %v1293 = vrsqrt.pop %v1187
          %v1294 = vmul.f32 %v1293, %v1187
          %v1295 = vmul.f32 %v1294, %v1293
          %v1296 = vmul.f32 0.5, %v1295
          %v1297 = vsub.f32 1.5, %v1296
          %v1298 = vmul.f32 %v1293, %v1297
          %vm1299 = vweird.f32 %v1187
          %vm1300 = vweird.f32 %v1293
          %vm1301 = vmor %vm1299, %vm1300
          %v1302 = vsel %vm1301, %v1293, %v1298
          %v1303 = vrsqrt.pop %v1188
          %v1304 = vmul.f32 %v1303, %v1188
          %v1305 = vmul.f32 %v1304, %v1303
          %v1306 = vmul.f32 0.5, %v1305
          %v1307 = vsub.f32 1.5, %v1306
          %v1308 = vmul.f32 %v1303, %v1307
          %vm1309 = vweird.f32 %v1188
          %vm1310 = vweird.f32 %v1303
          %vm1311 = vmor %vm1309, %vm1310
          %v1312 = vsel %vm1311, %v1303, %v1308
          %v1313 = vrsqrt.pop %v1189
          %v1314 = vmul.f32 %v1313, %v1189
          %v1315 = vmul.f32 %v1314, %v1313
          %v1316 = vmul.f32 0.5, %v1315
          %v1317 = vsub.f32 1.5, %v1316
          %v1318 = vmul.f32 %v1313, %v1317
          %vm1319 = vweird.f32 %v1189
          %vm1320 = vweird.f32 %v1313
          %vm1321 = vmor %vm1319, %vm1320
          %v1322 = vsel %vm1321, %v1313, %v1318
          %v1323 = vrsqrt.pop %v1190
          %v1324 = vmul.f32 %v1323, %v1190
          %v1325 = vmul.f32 %v1324, %v1323
          %v1326 = vmul.f32 0.5, %v1325
          %v1327 = vsub.f32 1.5, %v1326
          %v1328 = vmul.f32 %v1323, %v1327
          %vm1329 = vweird.f32 %v1190
          %vm1330 = vweird.f32 %v1323
          %vm1331 = vmor %vm1329, %vm1330
          %v1332 = vsel %vm1331, %v1323, %v1328
          %v1333 = vrsqrt.pop %v1191
          %v1334 = vmul.f32 %v1333, %v1191
          %v1335 = vmul.f32 %v1334, %v1333
          %v1336 = vmul.f32 0.5, %v1335
          %v1337 = vsub.f32 1.5, %v1336
          %v1338 = vmul.f32 %v1333, %v1337
          %vm1339 = vweird.f32 %v1191
          %vm1340 = vweird.f32 %v1333
          %vm1341 = vmor %vm1339, %vm1340
          %v1342 = vsel %vm1341, %v1333, %v1338
          %v1343 = vrsqrt.pop %v1192
          %v1344 = vmul.f32 %v1343, %v1192
          %v1345 = vmul.f32 %v1344, %v1343
          %v1346 = vmul.f32 0.5, %v1345
          %v1347 = vsub.f32 1.5, %v1346
          %v1348 = vmul.f32 %v1343, %v1347
          %vm1349 = vweird.f32 %v1192
          %vm1350 = vweird.f32 %v1343
          %vm1351 = vmor %vm1349, %vm1350
          %v1352 = vsel %vm1351, %v1343, %v1348
          %v1353 = vmul.f32 %v1097, %v1202
          %v1354 = vmul.f32 %v1098, %v1212
          %v1355 = vmul.f32 %v1099, %v1222
          %v1356 = vmul.f32 %v1100, %v1232
          %v1357 = vmul.f32 %v1101, %v1242
          %v1358 = vmul.f32 %v1102, %v1252
          %v1359 = vmul.f32 %v1103, %v1262
          %v1360 = vmul.f32 %v1104, %v1272
          %v1361 = vmul.f32 %v1105, %v1282
          %v1362 = vmul.f32 %v1106, %v1292
          %v1363 = vmul.f32 %v1107, %v1302
          %v1364 = vmul.f32 %v1108, %v1312
          %v1365 = vmul.f32 %v1109, %v1322
          %v1366 = vmul.f32 %v1110, %v1332
          %v1367 = vmul.f32 %v1111, %v1342
          %v1368 = vmul.f32 %v1112, %v1352
          %v1369 = vld [vmem:[%s7] sm:$0x1]
          %v1371 = vperm.slane %v1369, 0
          %v1373 = vmul.f32 %v1353, %v1371
          %v1374 = vmul.f32 %v1354, %v1371
          %v1375 = vmul.f32 %v1355, %v1371
          %v1376 = vmul.f32 %v1356, %v1371
          %v1377 = vmul.f32 %v1357, %v1371
          %v1378 = vmul.f32 %v1358, %v1371
          %v1379 = vmul.f32 %v1359, %v1371
          %v1380 = vmul.f32 %v1360, %v1371
          %v1381 = vmul.f32 %v1361, %v1371
          %v1382 = vmul.f32 %v1362, %v1371
          %v1383 = vmul.f32 %v1363, %v1371
          %v1384 = vmul.f32 %v1364, %v1371
          %v1385 = vmul.f32 %v1365, %v1371
          %v1386 = vmul.f32 %v1366, %v1371
          %v1387 = vmul.f32 %v1367, %v1371
          %v1388 = vmul.f32 %v1368, %v1371
          %v1389 = vld [vmem:[%s8] sm:$0x1]
          %v1391 = vperm.slane %v1389, 0
          %v1393 = vadd.f32 %v1373, %v1391
          %v1394 = vadd.f32 %v1374, %v1391
          %v1395 = vadd.f32 %v1375, %v1391
          %v1396 = vadd.f32 %v1376, %v1391
          %v1397 = vadd.f32 %v1377, %v1391
          %v1398 = vadd.f32 %v1378, %v1391
          %v1399 = vadd.f32 %v1379, %v1391
          %v1400 = vadd.f32 %v1380, %v1391
          %v1401 = vadd.f32 %v1381, %v1391
          %v1402 = vadd.f32 %v1382, %v1391
          %v1403 = vadd.f32 %v1383, %v1391
          %v1404 = vadd.f32 %v1384, %v1391
          %v1405 = vadd.f32 %v1385, %v1391
          %v1406 = vadd.f32 %v1386, %v1391
          %v1407 = vadd.f32 %v1387, %v1391
          %v1408 = vadd.f32 %v1388, %v1391
          %1409 = vst [vmem:[%s482] sm:$0xff] %v1393
          %1410 = vst [vmem:[%s482 + $0x8] sm:$0xff] %v1394
          %1411 = vst [vmem:[%s482 + $0x10] sm:$0xff] %v1395
          %1412 = vst [vmem:[%s482 + $0x18] sm:$0xff] %v1396
          %1413 = vst [vmem:[%s482 + $0x20] sm:$0xff] %v1397
          %1414 = vst [vmem:[%s482 + $0x28] sm:$0xff] %v1398
          %1415 = vst [vmem:[%s482 + $0x30] sm:$0xff] %v1399
          %1416 = vst [vmem:[%s482 + $0x38] sm:$0xff] %v1400
          %1417 = vst [vmem:[%s482 + $0x40] sm:$0xff] %v1401
          %1418 = vst [vmem:[%s482 + $0x48] sm:$0xff] %v1402
          %1419 = vst [vmem:[%s482 + $0x50] sm:$0xff] %v1403
          %1420 = vst [vmem:[%s482 + $0x58] sm:$0xff] %v1404
          %1421 = vst [vmem:[%s482 + $0x60] sm:$0xff] %v1405
          %1422 = vst [vmem:[%s482 + $0x68] sm:$0xff] %v1406
          %1423 = vst [vmem:[%s482 + $0x70] sm:$0xff] %v1407
          %1424 = vst [vmem:[%s482 + $0x78] sm:$0xff] %v1408
        $region84: #{tpu_custom_call.1} parent=55 // pred_fallthru
          _
        %s1425 = sand.u32 %s256, 1
        %s1426 = scalar_lea.sflag [#allocation5], %s1425
        %s1427 = sand.u32 %s256, 1
        %s1428 = smul.addr %s1427, 128
        %s1429 = scalar_lea.vmem [#allocation12], %s1428
        // Predicated region
        $region85: #{tpu_custom_call.1} parent=55 // pred_check
          %p1430 = pneg %p266
        $region86: #{tpu_custom_call.1} parent=55 // pred_check_branch
          %1432 = sbr.rel (%p1430) target = $region88
        $region87: #{tpu_custom_call.1} parent=55 // pred_region
          %s1433 = smul.u32 16, %s34
          %1435 = vsyncadd %s1426, 0
          %s1436 = smul.addr %s1433, 8
          %s1437 = scalar_lea.hbm %s9, %s1436
          %s1438 = sshll.u32 %s1429, 4
          %s1439 = int_to_ptr.vmem [resolvable:$true] %s1438
          %s1440 = sshll.u32 %s1437, 4
          %s1441 = int_to_ptr.hbm [resolvable:$true] %s1440
          %1446 = dma.vmem_to_hbm [thread:$0]  %s1439, 2048, %s1441, %s1426, 128, 128, 8
        $region88: #{tpu_custom_call.1} parent=55 // pred_fallthru
          _
      $region56: #{tpu_custom_call.1} parent=5 // pred_fallthru
        _
      %p1447 = scmp.le.s32.totalorder 2, %s25
      // Predicated region
      $region89: #{tpu_custom_call.1} parent=5 // pred_check
        %p1448 = pneg %p1447
      $region90: #{tpu_custom_call.1} parent=5 // pred_check_branch
        %1450 = sbr.rel (%p1448) target = $region92
      $region91: #{tpu_custom_call.1} parent=5 // pred_region
        %s1451 = ssub.s32 %s25, 2
        // Predicated region
        $region93: #{tpu_custom_call.1} parent=91 // pred_check
          %p1452 = pneg %p272
        $region94: #{tpu_custom_call.1} parent=91 // pred_check_branch
          %1454 = sbr.rel (%p1452) target = $region96
        $region95: #{tpu_custom_call.1} parent=91 // pred_region
          %s1455 = sand.u32 %s257, 1
          %s1456 = scalar_lea.sflag [#allocation5], %s1455
          %s1457 = sand.u32 %s257, 1
          %s1458 = smul.addr %s1457, 128
          %s1459 = scalar_lea.vmem [#allocation12], %s1458
          %1461 = dma.done %s1456, 2048
        $region96: #{tpu_custom_call.1} parent=91 // pred_fallthru
          _
      $region92: #{tpu_custom_call.1} parent=5 // pred_fallthru
        _
    $region6: #{tpu_custom_call.1} parent=1 // loop_footer
      %s29 = sadd.s32 1, %s25
    $region7: #{tpu_custom_call.1} parent=1 // loop_footer_branch
      %24 = sbr.rel target = $region3
    $region8: #{tpu_custom_call.1} parent=1 // loop_exit
      _
    %1462 = vsyncpa [#allocation4], 1
    %s1463 = scalar_lea.sflag [#allocation4], 1
    %1464 = vsyncpa %s1463, 1
    %1465 = vsyncpa [#allocation7], 1
    %s1466 = scalar_lea.sflag [#allocation7], 1
    %1467 = vsyncpa %s1466, 1
    %1468 = vsyncpa [#allocation10], 1
    %1469 = vsyncpa [#allocation5], 1
    %s1470 = scalar_lea.sflag [#allocation5], 1
    %1471 = vsyncpa %s1470, 1

</llo_original>
